<compile_context>
chip_gen: v7x
topology: tpu7x:2x2x1
jax: 0.10.0
libtpu: 0.0.40
codegen_flags: <defaults>
</compile_context>

<pallas_src>
from functools import partial

import jax
import jax.numpy as jnp
from jax import lax
from jax.experimental import pallas as pl
from jax.experimental.pallas import tpu as pltpu


# ----------------------------------------------------------------------------
# Fused nearest-codebook kernel: chunked distance matmul -> running argmin
# ----------------------------------------------------------------------------

def _vq_argmin_kernel(z_ref, emb_ref, esq_ref,          # inputs
                      idx_ref,                          # output
                      *, tn, n_chunks, n_e_valid, mask_last_chunk):
    # z_ref:   (tm, e_dim)  bf16, pre-scaled by -2 in the wrapper
    # emb_ref: (n_pad, e_dim) bf16, VMEM-resident (constant index_map -> fetched once)
    # esq_ref: (1, n_pad)   f32 exact ||e||^2
    z = z_ref[...]                                      # (tm, e_dim)
    tm = z.shape[0]

    run_min = jnp.full((tm, 1), jnp.inf, dtype=jnp.float32)
    run_idx = jnp.zeros((tm, 1), dtype=jnp.int32)

    # Static (unrolled) loop over codebook chunks: n_chunks is a Python constant.
    # TODO(synk): for very large codebooks (n_chunks >> 64) switch to lax.fori_loop with
    # pl.ds dynamic slices to bound code size.
    for c in range(n_chunks):
        e_chunk = emb_ref[pl.ds(c * tn, tn), :]         # (tn, e_dim) bf16, static slice
        # Distance scores for this chunk:  ||e||^2 + (-2 z).e   (MXU, f32 accumulation).
        cross = lax.dot_general(
            z, e_chunk,
            dimension_numbers=(((1,), (1,)), ((), ())),
            preferred_element_type=jnp.float32)          # (tm, tn)
        scores = esq_ref[:, pl.ds(c * tn, tn)] + cross   # (1, tn) broadcast over rows

        cols = lax.broadcasted_iota(jnp.int32, scores.shape, 1) + c * tn
        if mask_last_chunk and c == n_chunks - 1:
            # Zero-padded codebook rows score exactly 0 and could beat real codewords;
            # mask them out (only emitted when n_e % tn != 0, only on the last chunk).
            scores = jnp.where(cols < n_e_valid, scores, jnp.inf)

        # Per-chunk argmin, first occurrence (matches torch.argmin tie-breaking).
        chunk_min = jnp.min(scores, axis=-1, keepdims=True)                       # (tm, 1)
        chunk_idx = jnp.min(jnp.where(scores == chunk_min, cols, jnp.int32(2 ** 30)),
                            axis=-1, keepdims=True)                               # (tm, 1)

        # Strict '<' keeps the first occurrence across chunks (torch semantics).
        better = chunk_min < run_min
        run_min = jnp.where(better, chunk_min, run_min)
        run_idx = jnp.where(better, chunk_idx, run_idx)

    idx_ref[...] = run_idx


# ----------------------------------------------------------------------------
# Wrapper: layout glue, the exact codebook gather and the loss scalar
# ----------------------------------------------------------------------------

def vector_quantizer2_forward(z_nchw, embedding, beta=0.25, *, tm=256, tn=256):
    """VectorQuantizer2.forward (legacy=True, remap=None, sane_index_shape=False)."""
    b, c, h, w = z_nchw.shape
    n_e, e_dim = embedding.shape
    assert c == e_dim, "input channels must equal e_dim"
    M = b * h * w

    # b c h w -> b h w c -> (M, e_dim), same as the reference rearrange + view.
    z_flat = jnp.transpose(z_nchw, (0, 2, 3, 1)).reshape(M, e_dim).astype(jnp.float32)
    emb_f32 = embedding.astype(jnp.float32)

    # Pad token / codebook counts to tile multiples (codebook padding masked in-kernel;
    # padded token rows are sliced off below).
    m_pad = pl.cdiv(M, tm) * tm
    n_pad = pl.cdiv(n_e, tn) * tn
    n_chunks = n_pad // tn

    # Fold the -2 into the bf16 z copy (exact power-of-two scale): scores = ||e||^2 + (-2z).e
    zf = jnp.pad((-2.0 * z_flat).astype(jnp.bfloat16), ((0, m_pad - M), (0, 0)))
    embp = jnp.pad(embedding.astype(jnp.bfloat16), ((0, n_pad - n_e), (0, 0)))
    esq = jnp.pad(jnp.sum(emb_f32 * emb_f32, axis=-1), (0, n_pad - n_e))[None, :]  # (1, n_pad) f32

    # VMEM budget: resident bf16 codebook + ||e||^2 + double-buffered z tiles + score tiles.
    vmem_needed = (2 * n_pad * e_dim * 2 + 2 * n_pad * 4
                   + 3 * tm * e_dim * 2 + 4 * tm * tn * 4 + (1 << 20))
    vmem_limit = int(min(max(vmem_needed, 32 * 1024 * 1024), 56 * 1024 * 1024))

    idx2d = pl.pallas_call(
        partial(_vq_argmin_kernel, tn=tn, n_chunks=n_chunks,
                n_e_valid=n_e, mask_last_chunk=(n_pad != n_e)),
        out_shape=jax.ShapeDtypeStruct((m_pad, 1), jnp.int32),
        grid_spec=pltpu.PrefetchScalarGridSpec(
            num_scalar_prefetch=0,
            grid=(m_pad // tm,),                          # 1-D grid over token tiles
            in_specs=[
                pl.BlockSpec((tm, e_dim), lambda i: (i, 0)),      # z tokens (streamed)
                pl.BlockSpec((n_pad, e_dim), lambda i: (0, 0)),   # codebook (resident, bf16)
                pl.BlockSpec((1, n_pad), lambda i: (0, 0)),       # ||e||^2 (resident, f32)
            ],
            out_specs=pl.BlockSpec((tm, 1), lambda i: (i, 0)),
        ),
        compiler_params=pltpu.CompilerParams(
            dimension_semantics=("parallel",),             # token tiles shard on v7x megacore
            vmem_limit_bytes=vmem_limit),
    )(zf, embp, esq)

    min_encoding_indices = idx2d[:M, 0]                    # int32 (torch returns int64)

    # Exact codebook gather + loss outside the kernel (one XLA gather + elementwise pass).
    z_q_flat = emb_f32[min_encoding_indices]               # (M, e_dim) exact codebook rows

    # legacy loss = mean((z_q.detach()-z)^2) + beta*mean((z_q-z.detach())^2);
    # forward value == (1 + beta) * mean((z_q - z)^2)  (detach only affects gradients).
    loss = (1.0 + beta) * jnp.mean((z_q_flat - z_flat) ** 2)

    # straight-through z_q = z + (z_q - z).detach()  ->  forward value == z_q.
    # TODO(synk): straight-through estimator / two-term loss gradient split are
    # autograd-only semantics and not represented in this forward implementation.
    z_q_nchw = jnp.transpose(z_q_flat.reshape(b, h, w, e_dim), (0, 3, 1, 2))

    # TODO(synk): remap / unknown_index='random' re-indexing (remap=None default) and
    # sane_index_shape reshaping are not implemented; perplexity/min_encodings are None
    # exactly as in the reference forward.
    return z_q_nchw, loss, (None, None, min_encoding_indices)


# ----------------------------------------------------------------------------
# Demo / self-check
# ----------------------------------------------------------------------------

if __name__ == "__main__":
    b, e_dim, h, w = 2, 32, 16, 16
    n_e, beta = 512, 0.25

    key = jax.random.PRNGKey(0)
    k_emb, k_z = jax.random.split(key)
    embedding = jax.random.uniform(k_emb, (n_e, e_dim), jnp.float32,
                                   -1.0 / n_e, 1.0 / n_e)        # torch uniform init
    z = jax.random.normal(k_z, (b, e_dim, h, w), jnp.float32)    # NCHW, like PyTorch

    fwd = jax.jit(partial(vector_quantizer2_forward, beta=beta))
    z_q, loss, (_, _, indices) = fwd(z, embedding)
    z_q = jax.block_until_ready(z_q)

    # --- shape / sanity checks ------------------------------------------------
    assert z_q.shape == z.shape, z_q.shape
    assert indices.shape == (b * h * w,), indices.shape
    assert bool(jnp.all(jnp.isfinite(z_q))) and bool(jnp.isfinite(loss))
    assert bool(jnp.all((indices >= 0) & (indices < n_e)))

    # --- pure-jnp reference checks ---------------------------------------------
    z_flat = jnp.transpose(z, (0, 2, 3, 1)).reshape(-1, e_dim)
    zq_flat = jnp.transpose(z_q, (0, 2, 3, 1)).reshape(-1, e_dim)

    # z_q is an exact f32 gather of the codebook rows picked by the kernel.
    assert bool(jnp.allclose(zq_flat, embedding[indices], rtol=0.0, atol=1e-7))

    # Chosen codewords must be (near-)optimal vs the exact f32 distance matrix
    # (bf16 MXU scores can flip only near-ties; error bound << 1e-3 at these scales).
    d_ref = (jnp.sum(z_flat ** 2, 1, keepdims=True) + jnp.sum(embedding ** 2, 1)[None, :]
             - 2.0 * z_flat @ embedding.T)
    d_min = jnp.min(d_ref, axis=1)
    d_got = jnp.sum((z_flat - zq_flat) ** 2, axis=1)
    assert bool(jnp.all(d_got <= d_min + 1e-3)), "non-optimal codeword selection"

    # Loss consistency with the reference (legacy) formula on the kernel's own z_q.
    loss_ref = (1.0 + beta) * jnp.mean((zq_flat - z_flat) ** 2)
    assert abs(float(loss) - float(loss_ref)) <= 1e-5 * (1.0 + abs(float(loss_ref)))

    print("KERNEL_OK")
</pallas_src>

<mosaic_0001>
module attributes {stable_mosaic.version = 11 : i64} {
  func.func @_vq_argmin_kernel(%arg0: i32, %arg1: memref<256x32xbf16, #tpu.memory_space<vmem>>, %arg2: memref<512x32xbf16, #tpu.memory_space<vmem>>, %arg3: memref<1x512xf32, #tpu.memory_space<vmem>>, %arg4: memref<256x1xi32, #tpu.memory_space<vmem>>) attributes {dimension_semantics = [#tpu.dimension_semantics<parallel>], iteration_bounds = array<i64: 2>, scalar_prefetch = 0 : i64, scratch_operands = 0 : i64, tpu.core_type = #tpu.core_type<tc>, window_params = [{transform_indices = @transform_0, window_bounds = array<i64: 256, 32>}, {pipeline_mode = #tpu.pipeline_mode<synchronous>, transform_indices = @transform_1, window_bounds = array<i64: 512, 32>}, {pipeline_mode = #tpu.pipeline_mode<synchronous>, transform_indices = @transform_2, window_bounds = array<i64: 1, 512>}, {transform_indices = @transform_3, window_bounds = array<i64: 256, 1>}]} {
    %c0 = arith.constant 0 : index
    %c0_0 = arith.constant 0 : index
    %0 = vector.load %arg1[%c0, %c0_0] : memref<256x32xbf16, #tpu.memory_space<vmem>>, vector<256x32xbf16>
    %cst = arith.constant 0x7F800000 : f32
    %1 = vector.broadcast %cst : f32 to vector<256x1xf32>
    %c0_i32 = arith.constant 0 : i32
    %2 = vector.broadcast %c0_i32 : i32 to vector<256x1xi32>
    %c0_1 = arith.constant 0 : index
    %c0_2 = arith.constant 0 : index
    %3 = vector.load %arg2[%c0_1, %c0_2] : memref<512x32xbf16, #tpu.memory_space<vmem>>, vector<256x32xbf16>
    %cst_3 = arith.constant dense<0.000000e+00> : vector<256x256xf32>
    %4 = tpu.matmul %0, %3, %cst_3 {dimension_numbers = #tpu.dot_dimension_numbers<[1], [1], [0], [0], [0, 0, 1, 0], [], []>} : vector<256x32xbf16>, vector<256x32xbf16>, vector<256x256xf32> -> vector<256x256xf32>
    %c0_4 = arith.constant 0 : index
    %c0_5 = arith.constant 0 : index
    %5 = vector.load %arg3[%c0_4, %c0_5] : memref<1x512xf32, #tpu.memory_space<vmem>>, vector<1x256xf32>
    %6 = vector.broadcast %5 : vector<1x256xf32> to vector<256x256xf32>
    %7 = arith.addf %6, %4 : vector<256x256xf32>
    %8 = tpu.iota {dimensions = array<i32: 1>} : vector<256x256xi32>
    %c0_i32_6 = arith.constant 0 : i32
    %9 = vector.broadcast %c0_i32_6 : i32 to vector<256x256xi32>
    %10 = arith.addi %8, %9 : vector<256x256xi32>
    %cst_7 = arith.constant dense<0x7F800000> : vector<256xf32>
    %11 = vector.multi_reduction <minimumf>, %7, %cst_7 [1] : vector<256x256xf32> to vector<256xf32>
    %12 = vector.shape_cast %11 : vector<256xf32> to vector<256x1xf32>
    %13 = vector.broadcast %12 : vector<256x1xf32> to vector<256x256xf32>
    %14 = arith.cmpf oeq, %7, %13 : vector<256x256xf32>
    %c1073741824_i32 = arith.constant 1073741824 : i32
    %15 = vector.broadcast %c1073741824_i32 : i32 to vector<256x256xi32>
    %16 = arith.select %14, %10, %15 : vector<256x256xi1>, vector<256x256xi32>
    %cst_8 = arith.constant dense<2147483647> : vector<256xi32>
    %17 = vector.multi_reduction <minsi>, %16, %cst_8 [1] : vector<256x256xi32> to vector<256xi32>
    %18 = vector.shape_cast %17 : vector<256xi32> to vector<256x1xi32>
    %19 = arith.cmpf olt, %12, %1 : vector<256x1xf32>
    %20 = arith.select %19, %12, %1 : vector<256x1xi1>, vector<256x1xf32>
    %21 = arith.select %19, %18, %2 : vector<256x1xi1>, vector<256x1xi32>
    %c256 = arith.constant 256 : index
    %c0_9 = arith.constant 0 : index
    %22 = vector.load %arg2[%c256, %c0_9] : memref<512x32xbf16, #tpu.memory_space<vmem>>, vector<256x32xbf16>
    %cst_10 = arith.constant dense<0.000000e+00> : vector<256x256xf32>
    %23 = tpu.matmul %0, %22, %cst_10 {dimension_numbers = #tpu.dot_dimension_numbers<[1], [1], [0], [0], [0, 0, 1, 0], [], []>} : vector<256x32xbf16>, vector<256x32xbf16>, vector<256x256xf32> -> vector<256x256xf32>
    %c0_11 = arith.constant 0 : index
    %c256_12 = arith.constant 256 : index
    %24 = vector.load %arg3[%c0_11, %c256_12] : memref<1x512xf32, #tpu.memory_space<vmem>>, vector<1x256xf32>
    %25 = vector.broadcast %24 : vector<1x256xf32> to vector<256x256xf32>
    %26 = arith.addf %25, %23 : vector<256x256xf32>
    %27 = tpu.iota {dimensions = array<i32: 1>} : vector<256x256xi32>
    %c256_i32 = arith.constant 256 : i32
    %28 = vector.broadcast %c256_i32 : i32 to vector<256x256xi32>
    %29 = arith.addi %27, %28 : vector<256x256xi32>
    %cst_13 = arith.constant dense<0x7F800000> : vector<256xf32>
    %30 = vector.multi_reduction <minimumf>, %26, %cst_13 [1] : vector<256x256xf32> to vector<256xf32>
    %31 = vector.shape_cast %30 : vector<256xf32> to vector<256x1xf32>
    %32 = vector.broadcast %31 : vector<256x1xf32> to vector<256x256xf32>
    %33 = arith.cmpf oeq, %26, %32 : vector<256x256xf32>
    %c1073741824_i32_14 = arith.constant 1073741824 : i32
    %34 = vector.broadcast %c1073741824_i32_14 : i32 to vector<256x256xi32>
    %35 = arith.select %33, %29, %34 : vector<256x256xi1>, vector<256x256xi32>
    %cst_15 = arith.constant dense<2147483647> : vector<256xi32>
    %36 = vector.multi_reduction <minsi>, %35, %cst_15 [1] : vector<256x256xi32> to vector<256xi32>
    %37 = vector.shape_cast %36 : vector<256xi32> to vector<256x1xi32>
    %38 = arith.cmpf olt, %31, %20 : vector<256x1xf32>
    %39 = arith.select %38, %37, %21 : vector<256x1xi1>, vector<256x1xi32>
    %c0_16 = arith.constant 0 : index
    %c0_17 = arith.constant 0 : index
    %40 = vector.load %arg4[%c0_16, %c0_17] : memref<256x1xi32, #tpu.memory_space<vmem>>, vector<256x1xi32>
    tpu.vector_store %arg4[%c0_16, %c0_17], %39 {strides = array<i32>} : memref<256x1xi32, #tpu.memory_space<vmem>>, vector<256x1xi32>,
    return
  }
  func.func @transform_0(%arg0: i32) -> (i32, i32) {
    %c0_i32 = arith.constant 0 : i32
    %c0_i32_0 = arith.constant 0 : i32
    return %arg0, %c0_i32 : i32, i32
  }
  func.func @transform_1(%arg0: i32) -> (i32, i32) {
    %c0_i32 = arith.constant 0 : i32
    %c0_i32_0 = arith.constant 0 : i32
    %c0_i32_1 = arith.constant 0 : i32
    return %c0_i32, %c0_i32_0 : i32, i32
  }
  func.func @transform_2(%arg0: i32) -> (i32, i32) {
    %c0_i32 = arith.constant 0 : i32
    %c0_i32_0 = arith.constant 0 : i32
    %c0_i32_1 = arith.constant 0 : i32
    return %c0_i32, %c0_i32_0 : i32, i32
  }
  func.func @transform_3(%arg0: i32) -> (i32, i32) {
    %c0_i32 = arith.constant 0 : i32
    %c0_i32_0 = arith.constant 0 : i32
    return %arg0, %c0_i32 : i32, i32
  }
}

</mosaic_0001>

<llo_original>
// kernel: vector_quantizer2_forward.1
$region0: #{vector_quantizer2_forward.1}
  #allocation0 [shape = 'u32[]', space=smem, size = 0x4, offset = 0x4, fixed_abs, tag = 'smem constant byte address 0x4 - core index']
  #allocation1 [shape = 'u32[144,128]{1,0:T(1,128)}', space=vmem, size = 0x12000, scoped, tag = 'internal scratch']
  %s0 = inlined_call_operand.vmem [shape: bf16[512,32], index: 0, kind: input, shape index: {}]
  %s1 = inlined_call_operand.vmem [shape: bf16[512,32], index: 1, kind: input, shape index: {}]
  %s2 = inlined_call_operand.vmem [shape: f32[1,512], index: 2, kind: input, shape index: {}]
  %s3 = inlined_call_operand.vmem [shape: s32[512,1], index: 3, kind: output, shape index: {}]
  %s4 = sld [smem:[#allocation0]]
  $region45: #{vector_quantizer2_forward.1} parent=0
    _
  %s6 = ssub.s32 1, %s4
  %s7 = scalar_select 0, %s6, %s4
  loop: start=0, step=1, limit=4
  $region2: #{vector_quantizer2_forward.1} parent=0 // loop_pre_header
    _
  $region3: #{vector_quantizer2_forward.1} parent=0 // loop_header
    %s9 = sphi 0, %s13
    %p10 = scmp.ge.s32.totalorder %s9, 4
    %s19 = sphi 0, %s21
    %s22 = sphi 0, %s19
    %s23 = sphi 0, %s22
    %s39 = sphi 0, %s23
    %s43 = sphi 0, %s43
    %s45 = sphi 0, %s43
    %s46 = sphi 0, %s45
    %s60 = sphi 0, %s46
    %s64 = sphi 0, %s64
    %s66 = sphi 0, %s64
    %s67 = sphi 0, %s66
    %s81 = sphi 0, %s67
    %s87 = sphi 0, %s89
    %s90 = sphi 0, %s87
    %s91 = sphi 0, %s90
    %s107 = sphi 0, %s91
  $region4: #{vector_quantizer2_forward.1} parent=0 // loop_header_branch
    %12 = sbr.rel (%p10) target = $region8
  $region5: #{vector_quantizer2_forward.1} parent=0 // loop_body
    %s14 = ssub.s32 %s9, 1
    %s15 = ssub.s32 %s9, 2
    %s16 = sadd.s32 %s9, 1
    %s17 = ssub.s32 %s9, %s16
    %p18 = scmp.eq.s32.totalorder %s17, 0
    %s20 = sadd.s32 %s19, 1
    %s21 = scalar_select %p18, %s19, %s20
    %p24 = pneg %p18
    %p25 = scmp.eq.s32.totalorder %s9, 1
    %p26 = por %p24, %p25
    %p27 = scmp.ne.s32.totalorder %s19, %s22
    %p28 = scmp.eq.s32.totalorder %s9, 0
    %p29 = por %p27, %p28
    %p30 = scmp.ne.s32.totalorder %s19, %s22
    %p31 = scmp.eq.s32.totalorder %s14, 1
    %p32 = por %p30, %p31
    %p33 = scmp.ne.s32.totalorder %s22, %s23
    %p34 = scmp.eq.s32.totalorder %s14, 0
    %p35 = por %p33, %p34
    %p36 = scmp.ne.s32.totalorder %s22, %s23
    %p37 = scmp.eq.s32.totalorder %s15, 1
    %p38 = por %p36, %p37
    %p40 = scmp.ne.s32.totalorder %s23, %s39
    %p41 = scmp.eq.s32.totalorder %s15, 0
    %p42 = por %p40, %p41
    %s44 = sadd.s32 %s43, 1
    %p47 = scmp.eq.s32.totalorder %s9, 1
    %p48 = scmp.ne.s32.totalorder %s43, %s45
    %p49 = scmp.eq.s32.totalorder %s9, 0
    %p50 = por %p48, %p49
    %p51 = scmp.ne.s32.totalorder %s43, %s45
    %p52 = scmp.eq.s32.totalorder %s14, 1
    %p53 = por %p51, %p52
    %p54 = scmp.ne.s32.totalorder %s45, %s46
    %p55 = scmp.eq.s32.totalorder %s14, 0
    %p56 = por %p54, %p55
    %p57 = scmp.ne.s32.totalorder %s45, %s46
    %p58 = scmp.eq.s32.totalorder %s15, 1
    %p59 = por %p57, %p58
    %p61 = scmp.ne.s32.totalorder %s46, %s60
    %p62 = scmp.eq.s32.totalorder %s15, 0
    %p63 = por %p61, %p62
    %s65 = sadd.s32 %s64, 1
    %p68 = scmp.eq.s32.totalorder %s9, 1
    %p69 = scmp.ne.s32.totalorder %s64, %s66
    %p70 = scmp.eq.s32.totalorder %s9, 0
    %p71 = por %p69, %p70
    %p72 = scmp.ne.s32.totalorder %s64, %s66
    %p73 = scmp.eq.s32.totalorder %s14, 1
    %p74 = por %p72, %p73
    %p75 = scmp.ne.s32.totalorder %s66, %s67
    %p76 = scmp.eq.s32.totalorder %s14, 0
    %p77 = por %p75, %p76
    %p78 = scmp.ne.s32.totalorder %s66, %s67
    %p79 = scmp.eq.s32.totalorder %s15, 1
    %p80 = por %p78, %p79
    %p82 = scmp.ne.s32.totalorder %s67, %s81
    %p83 = scmp.eq.s32.totalorder %s15, 0
    %p84 = por %p82, %p83
    %s85 = ssub.s32 %s9, %s16
    %p86 = scmp.eq.s32.totalorder %s85, 0
    %s88 = sadd.s32 %s87, 1
    %s89 = scalar_select %p86, %s87, %s88
    %p92 = pneg %p86
    %p93 = scmp.eq.s32.totalorder %s9, 1
    %p94 = por %p92, %p93
    %p95 = scmp.ne.s32.totalorder %s87, %s90
    %p96 = scmp.eq.s32.totalorder %s9, 0
    %p97 = por %p95, %p96
    %p98 = scmp.ne.s32.totalorder %s87, %s90
    %p99 = scmp.eq.s32.totalorder %s14, 1
    %p100 = por %p98, %p99
    %p101 = scmp.ne.s32.totalorder %s90, %s91
    %p102 = scmp.eq.s32.totalorder %s14, 0
    %p103 = por %p101, %p102
    %p104 = scmp.ne.s32.totalorder %s90, %s91
    %p105 = scmp.eq.s32.totalorder %s15, 1
    %p106 = por %p104, %p105
    %p108 = scmp.ne.s32.totalorder %s91, %s107
    %p109 = scmp.eq.s32.totalorder %s15, 0
    %p110 = por %p108, %p109
    %p111 = scmp.le.s32.totalorder 1, %s9
    %p112 = scmp.lt.s32.totalorder %s9, 3
    %p113 = pnand %p111, %p112
    %p114 = pneg %p113
    // Predicated region
    $region9: #{vector_quantizer2_forward.1} parent=5 // pred_check
      _
    $region10: #{vector_quantizer2_forward.1} parent=5 // pred_check_branch
      %116 = sbr.rel (%p113) target = $region12
    $region11: #{vector_quantizer2_forward.1} parent=5 // pred_region
      %s117 = ssub.s32 %s9, 1
      // Predicated region
      $region13: #{vector_quantizer2_forward.1} parent=11 // pred_check
        %p118 = pneg %p56
      $region14: #{vector_quantizer2_forward.1} parent=11 // pred_check_branch
        %120 = sbr.rel (%p118) target = $region16
      $region15: #{vector_quantizer2_forward.1} parent=11 // pred_region
        _
      $region16: #{vector_quantizer2_forward.1} parent=11 // pred_fallthru
        _
      // Predicated region
      $region17: #{vector_quantizer2_forward.1} parent=11 // pred_check
        %p121 = pneg %p77
      $region18: #{vector_quantizer2_forward.1} parent=11 // pred_check_branch
        %123 = sbr.rel (%p121) target = $region20
      $region19: #{vector_quantizer2_forward.1} parent=11 // pred_region
        _
      $region20: #{vector_quantizer2_forward.1} parent=11 // pred_fallthru
        _
    $region12: #{vector_quantizer2_forward.1} parent=5 // pred_fallthru
      _
    %p124 = scmp.lt.s32.totalorder %s9, 2
    // Predicated region
    $region21: #{vector_quantizer2_forward.1} parent=5 // pred_check
      %p125 = pneg %p124
    $region22: #{vector_quantizer2_forward.1} parent=5 // pred_check_branch
      %127 = sbr.rel (%p125) target = $region24
    $region23: #{vector_quantizer2_forward.1} parent=5 // pred_region
      // Predicated region
      $region25: #{vector_quantizer2_forward.1} parent=23 // pred_check
        %p128 = pneg %p29
      $region26: #{vector_quantizer2_forward.1} parent=23 // pred_check_branch
        %130 = sbr.rel (%p128) target = $region28
      $region27: #{vector_quantizer2_forward.1} parent=23 // pred_region
        %s131 = smul.u32 32, %s9
        %p132 = scmp.lt.s32.totalorder %s131, 63
        %s133 = scalar_select %p132, %s131, 63
        %s134 = smul.addr %s133, 4
        %s135 = scalar_lea.vmem %s0, %s134
        %s136 = smul.u32 32, %s9
      $region28: #{vector_quantizer2_forward.1} parent=23 // pred_fallthru
        _
    $region24: #{vector_quantizer2_forward.1} parent=5 // pred_fallthru
      _
    %p137 = scmp.le.s32.totalorder 1, %s9
    %p138 = scmp.lt.s32.totalorder %s9, 3
    %p139 = pnand %p137, %p138
    %p140 = pneg %p139
    // Predicated region
    $region29: #{vector_quantizer2_forward.1} parent=5 // pred_check
      _
    $region30: #{vector_quantizer2_forward.1} parent=5 // pred_check_branch
      %142 = sbr.rel (%p139) target = $region32
    $region31: #{vector_quantizer2_forward.1} parent=5 // pred_region
      %s143 = ssub.s32 %s9, 1
      %s144 = smul.u32 32, %s14
      %p145 = scmp.lt.s32.totalorder %s144, 63
      %s146 = scalar_select %p145, %s144, 63
      %s147 = smul.addr %s146, 4
      %s148 = scalar_lea.vmem %s0, %s147
      %p149 = pneg %p35
      %p150 = pneg %p32
      %p151 = pneg %p56
      %p152 = pneg %p53
      %p153 = pneg %p77
      %p154 = pneg %p74
      %p155 = pneg %p103
      %p156 = pneg %p100
      %s157 = smul.u32 32, %s14
      %p158 = scmp.lt.s32.totalorder %s157, 63
      %s159 = scalar_select %p158, %s157, 63
      %s160 = smul.addr %s159, 8
      %s161 = scalar_lea.vmem %s3, %s160
      %s162 = smul.u32 32, %s14
      %p163 = scmp.lt.s32.totalorder %s162, 63
      %s164 = scalar_select %p163, %s162, 63
      %s165 = smul.addr %s164, 4
      %s166 = scalar_lea.vmem %s0, %s165
      %s167 = smul.u32 32, %s14
      %s168 = smul.u32 32, %s14
      %p169 = scmp.lt.s32.totalorder %s168, 63
      %s170 = scalar_select %p169, %s168, 63
      %s171 = smul.addr %s170, 8
      %s172 = scalar_lea.vmem %s3, %s171
      %s173 = smul.u32 32, %s14
      %v175 = vld [vmem:[%s166] sm:$0xf]
      %v176 = vld [vmem:[%s166 + $0x4] sm:$0xf]
      %v177 = vld [vmem:[%s166 + $0x8] sm:$0xf]
      %v178 = vld [vmem:[%s166 + $0xc] sm:$0xf]
      %v179 = vld [vmem:[%s166 + $0x10] sm:$0xf]
      %v180 = vld [vmem:[%s166 + $0x14] sm:$0xf]
      %v181 = vld [vmem:[%s166 + $0x18] sm:$0xf]
      %v182 = vld [vmem:[%s166 + $0x1c] sm:$0xf]
      %v183 = vld [vmem:[%s166 + $0x20] sm:$0xf]
      %v184 = vld [vmem:[%s166 + $0x24] sm:$0xf]
      %v185 = vld [vmem:[%s166 + $0x28] sm:$0xf]
      %v186 = vld [vmem:[%s166 + $0x2c] sm:$0xf]
      %v187 = vld [vmem:[%s166 + $0x30] sm:$0xf]
      %v188 = vld [vmem:[%s166 + $0x34] sm:$0xf]
      %v189 = vld [vmem:[%s166 + $0x38] sm:$0xf]
      %v190 = vld [vmem:[%s166 + $0x3c] sm:$0xf]
      %v191 = vld [vmem:[%s166 + $0x40] sm:$0xf]
      %v192 = vld [vmem:[%s166 + $0x44] sm:$0xf]
      %v193 = vld [vmem:[%s166 + $0x48] sm:$0xf]
      %v194 = vld [vmem:[%s166 + $0x4c] sm:$0xf]
      %v195 = vld [vmem:[%s166 + $0x50] sm:$0xf]
      %v196 = vld [vmem:[%s166 + $0x54] sm:$0xf]
      %v197 = vld [vmem:[%s166 + $0x58] sm:$0xf]
      %v198 = vld [vmem:[%s166 + $0x5c] sm:$0xf]
      %v199 = vld [vmem:[%s166 + $0x60] sm:$0xf]
      %v200 = vld [vmem:[%s166 + $0x64] sm:$0xf]
      %v201 = vld [vmem:[%s166 + $0x68] sm:$0xf]
      %v202 = vld [vmem:[%s166 + $0x6c] sm:$0xf]
      %v203 = vld [vmem:[%s166 + $0x70] sm:$0xf]
      %v204 = vld [vmem:[%s166 + $0x74] sm:$0xf]
      %v205 = vld [vmem:[%s166 + $0x78] sm:$0xf]
      %v206 = vld [vmem:[%s166 + $0x7c] sm:$0xf]
      %v207 = vld [vmem:[%s1] sm:$0xf]
      %v208 = vld [vmem:[%s1 + $0x4] sm:$0xf]
      %v209 = vld [vmem:[%s1 + $0x8] sm:$0xf]
      %v210 = vld [vmem:[%s1 + $0xc] sm:$0xf]
      %v211 = vld [vmem:[%s1 + $0x10] sm:$0xf]
      %v212 = vld [vmem:[%s1 + $0x14] sm:$0xf]
      %v213 = vld [vmem:[%s1 + $0x18] sm:$0xf]
      %v214 = vld [vmem:[%s1 + $0x1c] sm:$0xf]
      %v215 = vld [vmem:[%s1 + $0x20] sm:$0xf]
      %v216 = vld [vmem:[%s1 + $0x24] sm:$0xf]
      %v217 = vld [vmem:[%s1 + $0x28] sm:$0xf]
      %v218 = vld [vmem:[%s1 + $0x2c] sm:$0xf]
      %v219 = vld [vmem:[%s1 + $0x30] sm:$0xf]
      %v220 = vld [vmem:[%s1 + $0x34] sm:$0xf]
      %v221 = vld [vmem:[%s1 + $0x38] sm:$0xf]
      %v222 = vld [vmem:[%s1 + $0x3c] sm:$0xf]
      %v223 = vld [vmem:[%s1 + $0x40] sm:$0xf]
      %v224 = vld [vmem:[%s1 + $0x44] sm:$0xf]
      %v225 = vld [vmem:[%s1 + $0x48] sm:$0xf]
      %v226 = vld [vmem:[%s1 + $0x4c] sm:$0xf]
      %v227 = vld [vmem:[%s1 + $0x50] sm:$0xf]
      %v228 = vld [vmem:[%s1 + $0x54] sm:$0xf]
      %v229 = vld [vmem:[%s1 + $0x58] sm:$0xf]
      %v230 = vld [vmem:[%s1 + $0x5c] sm:$0xf]
      %v231 = vld [vmem:[%s1 + $0x60] sm:$0xf]
      %v232 = vld [vmem:[%s1 + $0x64] sm:$0xf]
      %v233 = vld [vmem:[%s1 + $0x68] sm:$0xf]
      %v234 = vld [vmem:[%s1 + $0x6c] sm:$0xf]
      %v235 = vld [vmem:[%s1 + $0x70] sm:$0xf]
      %v236 = vld [vmem:[%s1 + $0x74] sm:$0xf]
      %v237 = vld [vmem:[%s1 + $0x78] sm:$0xf]
      %v238 = vld [vmem:[%s1 + $0x7c] sm:$0xf]
      %v271 = vunpack.c.l.b16 %v175
      %v272 = vunpack.c.l.b16 %v176
      %v273 = vunpack.c.l.b16 %v177
      %v274 = vunpack.c.l.b16 %v178
      %v275 = vunpack.c.l.b16 %v179
      %v276 = vunpack.c.l.b16 %v180
      %v277 = vunpack.c.l.b16 %v181
      %v278 = vunpack.c.l.b16 %v182
      %v279 = vunpack.c.l.b16 %v183
      %v280 = vunpack.c.l.b16 %v184
      %v281 = vunpack.c.l.b16 %v185
      %v282 = vunpack.c.l.b16 %v186
      %v283 = vunpack.c.l.b16 %v187
      %v284 = vunpack.c.l.b16 %v188
      %v285 = vunpack.c.l.b16 %v189
      %v286 = vunpack.c.l.b16 %v190
      %v287 = vunpack.c.l.b16 %v191
      %v288 = vunpack.c.l.b16 %v192
      %v289 = vunpack.c.l.b16 %v193
      %v290 = vunpack.c.l.b16 %v194
      %v291 = vunpack.c.l.b16 %v195
      %v292 = vunpack.c.l.b16 %v196
      %v293 = vunpack.c.l.b16 %v197
      %v294 = vunpack.c.l.b16 %v198
      %v295 = vunpack.c.l.b16 %v199
      %v296 = vunpack.c.l.b16 %v200
      %v297 = vunpack.c.l.b16 %v201
      %v298 = vunpack.c.l.b16 %v202
      %v299 = vunpack.c.l.b16 %v203
      %v300 = vunpack.c.l.b16 %v204
      %v301 = vunpack.c.l.b16 %v205
      %v302 = vunpack.c.l.b16 %v206
      %v303 = vpack.c.b16 %v272, %v271
      %v304 = vpack.c.b16 %v274, %v273
      %v305 = vpack.c.b16 %v276, %v275
      %v306 = vpack.c.b16 %v278, %v277
      %v307 = vpack.c.b16 %v280, %v279
      %v308 = vpack.c.b16 %v282, %v281
      %v309 = vpack.c.b16 %v284, %v283
      %v310 = vpack.c.b16 %v286, %v285
      %v311 = vpack.c.b16 %v288, %v287
      %v312 = vpack.c.b16 %v290, %v289
      %v313 = vpack.c.b16 %v292, %v291
      %v314 = vpack.c.b16 %v294, %v293
      %v315 = vpack.c.b16 %v296, %v295
      %v316 = vpack.c.b16 %v298, %v297
      %v317 = vpack.c.b16 %v300, %v299
      %v318 = vpack.c.b16 %v302, %v301
      %v351 = vunpack.c.l.b16 %v207
      %v352 = vunpack.c.l.b16 %v208
      %v353 = vunpack.c.l.b16 %v209
      %v354 = vunpack.c.l.b16 %v210
      %v355 = vunpack.c.l.b16 %v211
      %v356 = vunpack.c.l.b16 %v212
      %v357 = vunpack.c.l.b16 %v213
      %v358 = vunpack.c.l.b16 %v214
      %v359 = vunpack.c.l.b16 %v215
      %v360 = vunpack.c.l.b16 %v216
      %v361 = vunpack.c.l.b16 %v217
      %v362 = vunpack.c.l.b16 %v218
      %v363 = vunpack.c.l.b16 %v219
      %v364 = vunpack.c.l.b16 %v220
      %v365 = vunpack.c.l.b16 %v221
      %v366 = vunpack.c.l.b16 %v222
      %v367 = vunpack.c.l.b16 %v223
      %v368 = vunpack.c.l.b16 %v224
      %v369 = vunpack.c.l.b16 %v225
      %v370 = vunpack.c.l.b16 %v226
      %v371 = vunpack.c.l.b16 %v227
      %v372 = vunpack.c.l.b16 %v228
      %v373 = vunpack.c.l.b16 %v229
      %v374 = vunpack.c.l.b16 %v230
      %v375 = vunpack.c.l.b16 %v231
      %v376 = vunpack.c.l.b16 %v232
      %v377 = vunpack.c.l.b16 %v233
      %v378 = vunpack.c.l.b16 %v234
      %v379 = vunpack.c.l.b16 %v235
      %v380 = vunpack.c.l.b16 %v236
      %v381 = vunpack.c.l.b16 %v237
      %v382 = vunpack.c.l.b16 %v238
      %v383 = vpack.c.b16 %v352, %v351
      %v384 = vpack.c.b16 %v354, %v353
      %v385 = vpack.c.b16 %v356, %v355
      %v386 = vpack.c.b16 %v358, %v357
      %v387 = vpack.c.b16 %v360, %v359
      %v388 = vpack.c.b16 %v362, %v361
      %v389 = vpack.c.b16 %v364, %v363
      %v390 = vpack.c.b16 %v366, %v365
      %v391 = vpack.c.b16 %v368, %v367
      %v392 = vpack.c.b16 %v370, %v369
      %v393 = vpack.c.b16 %v372, %v371
      %v394 = vpack.c.b16 %v374, %v373
      %v395 = vpack.c.b16 %v376, %v375
      %v396 = vpack.c.b16 %v378, %v377
      %v397 = vpack.c.b16 %v380, %v379
      %v398 = vpack.c.b16 %v382, %v381
      %vm399 = vcmask 261120
      %v401 = vsel %vm399, %v303, 0
      %v404 = vsel %vm399, %v304, 0
      %v407 = vsel %vm399, %v305, 0
      %v410 = vsel %vm399, %v306, 0
      %v413 = vsel %vm399, %v307, 0
      %v416 = vsel %vm399, %v308, 0
      %v419 = vsel %vm399, %v309, 0
      %v422 = vsel %vm399, %v310, 0
      %v425 = vsel %vm399, %v311, 0
      %v428 = vsel %vm399, %v312, 0
      %v431 = vsel %vm399, %v313, 0
      %v434 = vsel %vm399, %v314, 0
      %v437 = vsel %vm399, %v315, 0
      %v440 = vsel %vm399, %v316, 0
      %v443 = vsel %vm399, %v317, 0
      %v446 = vsel %vm399, %v318, 0
      %v449 = vsel %vm399, %v383, 0
      %v452 = vsel %vm399, %v384, 0
      %v455 = vsel %vm399, %v385, 0
      %v458 = vsel %vm399, %v386, 0
      %v461 = vsel %vm399, %v387, 0
      %v464 = vsel %vm399, %v388, 0
      %v467 = vsel %vm399, %v389, 0
      %v470 = vsel %vm399, %v390, 0
      %v473 = vsel %vm399, %v391, 0
      %v476 = vsel %vm399, %v392, 0
      %v479 = vsel %vm399, %v393, 0
      %v482 = vsel %vm399, %v394, 0
      %v485 = vsel %vm399, %v395, 0
      %v488 = vsel %vm399, %v396, 0
      %v491 = vsel %vm399, %v397, 0
      %v494 = vsel %vm399, %v398, 0
      %496 = vmatprep.subr.bf16.mxu0 0
      %497 = vmatpush1.bf16.xpose.msra.mxu0 %v449
      %498 = vmatprep.subr.bf16.mxu0 0
      %499 = vmatpush1.bf16.xpose.msra.mxu0 %v452
      %500 = vmatprep.subr.bf16.mxu0 0
      %501 = vmatpush1.bf16.xpose.msra.mxu0 %v455
      %502 = vmatprep.subr.bf16.mxu0 0
      %503 = vmatpush1.bf16.xpose.msra.mxu0 %v458
      %504 = vmatprep.subr.bf16.mxu0 0
      %505 = vmatpush1.bf16.xpose.msra.mxu0 %v461
      %506 = vmatprep.subr.bf16.mxu0 0
      %507 = vmatpush1.bf16.xpose.msra.mxu0 %v464
      %508 = vmatprep.subr.bf16.mxu0 0
      %509 = vmatpush1.bf16.xpose.msra.mxu0 %v467
      %510 = vmatprep.subr.bf16.mxu0 0
      %511 = vmatpush1.bf16.xpose.msra.mxu0 %v470
      %512 = vmatprep.subr.bf16.mxu0 0
      %513 = vmatpush1.bf16.xpose.msra.mxu0 %v473
      %514 = vmatprep.subr.bf16.mxu0 0
      %515 = vmatpush1.bf16.xpose.msra.mxu0 %v476
      %516 = vmatprep.subr.bf16.mxu0 0
      %517 = vmatpush1.bf16.xpose.msra.mxu0 %v479
      %518 = vmatprep.subr.bf16.mxu0 0
      %519 = vmatpush1.bf16.xpose.msra.mxu0 %v482
      %520 = vmatprep.subr.bf16.mxu0 0
      %521 = vmatpush1.bf16.xpose.msra.mxu0 %v485
      %522 = vmatprep.subr.bf16.mxu0 0
      %523 = vmatpush1.bf16.xpose.msra.mxu0 %v488
      %524 = vmatprep.subr.bf16.mxu0 0
      %525 = vmatpush1.bf16.xpose.msra.mxu0 %v491
      %526 = vmatprep.subr.bf16.mxu0 0
      %527 = vmatpush1.bf16.xpose.msra.mxu0 %v494
      %528 = vmatprep.mubr.bf16.mxu0 0
      %529 = vmatmul.mubr.bf16.gmra.mrb[0].mxu0 %v401
      %v530 = vpop.f32.mrb[0].mxu0
      %v531 = vadd.f32 0.0, %v530
      %v532 = vpop.f32.mrb[0].mxu0
      %v533 = vadd.f32 0.0, %v532
      %v534 = vpop.f32.mrb[0].mxu0
      %v535 = vadd.f32 0.0, %v534
      %v536 = vpop.f32.mrb[0].mxu0
      %v537 = vadd.f32 0.0, %v536
      %538 = vmatprep.mubr.bf16.mxu0 0
      %539 = vmatmul.mubr.bf16.gmra.mrb[0].mxu0 %v404
      %v540 = vpop.f32.mrb[0].mxu0
      %v541 = vadd.f32 0.0, %v540
      %v542 = vpop.f32.mrb[0].mxu0
      %v543 = vadd.f32 0.0, %v542
      %v544 = vpop.f32.mrb[0].mxu0
      %v545 = vadd.f32 0.0, %v544
      %v546 = vpop.f32.mrb[0].mxu0
      %v547 = vadd.f32 0.0, %v546
      %548 = vmatprep.mubr.bf16.mxu0 0
      %549 = vmatmul.mubr.bf16.gmra.mrb[0].mxu0 %v407
      %v550 = vpop.f32.mrb[0].mxu0
      %v551 = vadd.f32 0.0, %v550
      %v552 = vpop.f32.mrb[0].mxu0
      %v553 = vadd.f32 0.0, %v552
      %v554 = vpop.f32.mrb[0].mxu0
      %v555 = vadd.f32 0.0, %v554
      %v556 = vpop.f32.mrb[0].mxu0
      %v557 = vadd.f32 0.0, %v556
      %558 = vmatprep.mubr.bf16.mxu0 0
      %559 = vmatmul.mubr.bf16.gmra.mrb[0].mxu0 %v410
      %v560 = vpop.f32.mrb[0].mxu0
      %v561 = vadd.f32 0.0, %v560
      %v562 = vpop.f32.mrb[0].mxu0
      %v563 = vadd.f32 0.0, %v562
      %v564 = vpop.f32.mrb[0].mxu0
      %v565 = vadd.f32 0.0, %v564
      %v566 = vpop.f32.mrb[0].mxu0
      %v567 = vadd.f32 0.0, %v566
      %568 = vmatprep.mubr.bf16.mxu0 0
      %569 = vmatmul.mubr.bf16.gmra.mrb[0].mxu0 %v413
      %v570 = vpop.f32.mrb[0].mxu0
      %v571 = vadd.f32 0.0, %v570
      %v572 = vpop.f32.mrb[0].mxu0
      %v573 = vadd.f32 0.0, %v572
      %v574 = vpop.f32.mrb[0].mxu0
      %v575 = vadd.f32 0.0, %v574
      %v576 = vpop.f32.mrb[0].mxu0
      %v577 = vadd.f32 0.0, %v576
      %578 = vmatprep.mubr.bf16.mxu0 0
      %579 = vmatmul.mubr.bf16.gmra.mrb[0].mxu0 %v416
      %v580 = vpop.f32.mrb[0].mxu0
      %v581 = vadd.f32 0.0, %v580
      %v582 = vpop.f32.mrb[0].mxu0
      %v583 = vadd.f32 0.0, %v582
      %v584 = vpop.f32.mrb[0].mxu0
      %v585 = vadd.f32 0.0, %v584
      %v586 = vpop.f32.mrb[0].mxu0
      %v587 = vadd.f32 0.0, %v586
      %588 = vmatprep.mubr.bf16.mxu0 0
      %589 = vmatmul.mubr.bf16.gmra.mrb[0].mxu0 %v419
      %v590 = vpop.f32.mrb[0].mxu0
      %v591 = vadd.f32 0.0, %v590
      %v592 = vpop.f32.mrb[0].mxu0
      %v593 = vadd.f32 0.0, %v592
      %v594 = vpop.f32.mrb[0].mxu0
      %v595 = vadd.f32 0.0, %v594
      %v596 = vpop.f32.mrb[0].mxu0
      %v597 = vadd.f32 0.0, %v596
      %598 = vmatprep.mubr.bf16.mxu0 0
      %599 = vmatmul.mubr.bf16.gmra.mrb[0].mxu0 %v422
      %v600 = vpop.f32.mrb[0].mxu0
      %v601 = vadd.f32 0.0, %v600
      %v602 = vpop.f32.mrb[0].mxu0
      %v603 = vadd.f32 0.0, %v602
      %v604 = vpop.f32.mrb[0].mxu0
      %v605 = vadd.f32 0.0, %v604
      %v606 = vpop.f32.mrb[0].mxu0
      %v607 = vadd.f32 0.0, %v606
      %608 = vmatprep.mubr.bf16.mxu0 0
      %609 = vmatmul.mubr.bf16.gmra.mrb[0].mxu0 %v425
      %v610 = vpop.f32.mrb[0].mxu0
      %v611 = vadd.f32 0.0, %v610
      %v612 = vpop.f32.mrb[0].mxu0
      %v613 = vadd.f32 0.0, %v612
      %v614 = vpop.f32.mrb[0].mxu0
      %v615 = vadd.f32 0.0, %v614
      %v616 = vpop.f32.mrb[0].mxu0
      %v617 = vadd.f32 0.0, %v616
      %618 = vmatprep.mubr.bf16.mxu0 0
      %619 = vmatmul.mubr.bf16.gmra.mrb[0].mxu0 %v428
      %v620 = vpop.f32.mrb[0].mxu0
      %v621 = vadd.f32 0.0, %v620
      %v622 = vpop.f32.mrb[0].mxu0
      %v623 = vadd.f32 0.0, %v622
      %v624 = vpop.f32.mrb[0].mxu0
      %v625 = vadd.f32 0.0, %v624
      %v626 = vpop.f32.mrb[0].mxu0
      %v627 = vadd.f32 0.0, %v626
      %628 = vmatprep.mubr.bf16.mxu0 0
      %629 = vmatmul.mubr.bf16.gmra.mrb[0].mxu0 %v431
      %v630 = vpop.f32.mrb[0].mxu0
      %v631 = vadd.f32 0.0, %v630
      %v632 = vpop.f32.mrb[0].mxu0
      %v633 = vadd.f32 0.0, %v632
      %v634 = vpop.f32.mrb[0].mxu0
      %v635 = vadd.f32 0.0, %v634
      %v636 = vpop.f32.mrb[0].mxu0
      %v637 = vadd.f32 0.0, %v636
      %638 = vmatprep.mubr.bf16.mxu0 0
      %639 = vmatmul.mubr.bf16.gmra.mrb[0].mxu0 %v434
      %v640 = vpop.f32.mrb[0].mxu0
      %v641 = vadd.f32 0.0, %v640
      %v642 = vpop.f32.mrb[0].mxu0
      %v643 = vadd.f32 0.0, %v642
      %v644 = vpop.f32.mrb[0].mxu0
      %v645 = vadd.f32 0.0, %v644
      %v646 = vpop.f32.mrb[0].mxu0
      %v647 = vadd.f32 0.0, %v646
      %648 = vmatprep.mubr.bf16.mxu0 0
      %649 = vmatmul.mubr.bf16.gmra.mrb[0].mxu0 %v437
      %v650 = vpop.f32.mrb[0].mxu0
      %v651 = vadd.f32 0.0, %v650
      %v652 = vpop.f32.mrb[0].mxu0
      %v653 = vadd.f32 0.0, %v652
      %v654 = vpop.f32.mrb[0].mxu0
      %v655 = vadd.f32 0.0, %v654
      %v656 = vpop.f32.mrb[0].mxu0
      %v657 = vadd.f32 0.0, %v656
      %658 = vmatprep.mubr.bf16.mxu0 0
      %659 = vmatmul.mubr.bf16.gmra.mrb[0].mxu0 %v440
      %v660 = vpop.f32.mrb[0].mxu0
      %v661 = vadd.f32 0.0, %v660
      %v662 = vpop.f32.mrb[0].mxu0
      %v663 = vadd.f32 0.0, %v662
      %v664 = vpop.f32.mrb[0].mxu0
      %v665 = vadd.f32 0.0, %v664
      %v666 = vpop.f32.mrb[0].mxu0
      %v667 = vadd.f32 0.0, %v666
      %668 = vmatprep.mubr.bf16.mxu0 0
      %669 = vmatmul.mubr.bf16.gmra.mrb[0].mxu0 %v443
      %v670 = vpop.f32.mrb[0].mxu0
      %v671 = vadd.f32 0.0, %v670
      %v672 = vpop.f32.mrb[0].mxu0
      %v673 = vadd.f32 0.0, %v672
      %v674 = vpop.f32.mrb[0].mxu0
      %v675 = vadd.f32 0.0, %v674
      %v676 = vpop.f32.mrb[0].mxu0
      %v677 = vadd.f32 0.0, %v676
      %678 = vmatprep.mubr.bf16.mxu0 0
      %679 = vmatmul.mubr.bf16.gmra.mrb[0].mxu0 %v446
      %v680 = vpop.f32.mrb[0].mxu0
      %v681 = vadd.f32 0.0, %v680
      %v682 = vpop.f32.mrb[0].mxu0
      %v683 = vadd.f32 0.0, %v682
      %v684 = vpop.f32.mrb[0].mxu0
      %v685 = vadd.f32 0.0, %v684
      %v686 = vpop.f32.mrb[0].mxu0
      %v687 = vadd.f32 0.0, %v686
      %688 = vdwg.mxu0
      %v689 = vld [vmem:[%s2] sm:$0x3]
      %v691 = vlaneseq
      %v692 = vshrl.u32 %v691, 7
      %v693 = vsub.s32 0, %v692
      %v694 = vrot.slane %v689, %v693
      %v695 = vlaneseq
      %v696 = vshrl.u32 %v695, 7
      %v697 = vsub.s32 1, %v696
      %v698 = vrot.slane %v689, %v697
      %v701 = vadd.f32 %v694, %v531
      %v702 = vadd.f32 %v698, %v533
      %v703 = vadd.f32 %v694, %v535
      %v704 = vadd.f32 %v698, %v537
      %v705 = vadd.f32 %v694, %v541
      %v706 = vadd.f32 %v698, %v543
      %v707 = vadd.f32 %v694, %v545
      %v708 = vadd.f32 %v698, %v547
      %v709 = vadd.f32 %v694, %v551
      %v710 = vadd.f32 %v698, %v553
      %v711 = vadd.f32 %v694, %v555
      %v712 = vadd.f32 %v698, %v557
      %v713 = vadd.f32 %v694, %v561
      %v714 = vadd.f32 %v698, %v563
      %v715 = vadd.f32 %v694, %v565
      %v716 = vadd.f32 %v698, %v567
      %v717 = vadd.f32 %v694, %v571
      %v718 = vadd.f32 %v698, %v573
      %v719 = vadd.f32 %v694, %v575
      %v720 = vadd.f32 %v698, %v577
      %v721 = vadd.f32 %v694, %v581
      %v722 = vadd.f32 %v698, %v583
      %v723 = vadd.f32 %v694, %v585
      %v724 = vadd.f32 %v698, %v587
      %v725 = vadd.f32 %v694, %v591
      %v726 = vadd.f32 %v698, %v593
      %v727 = vadd.f32 %v694, %v595
      %v728 = vadd.f32 %v698, %v597
      %v729 = vadd.f32 %v694, %v601
      %v730 = vadd.f32 %v698, %v603
      %v731 = vadd.f32 %v694, %v605
      %v732 = vadd.f32 %v698, %v607
      %v733 = vadd.f32 %v694, %v611
      %v734 = vadd.f32 %v698, %v613
      %v735 = vadd.f32 %v694, %v615
      %v736 = vadd.f32 %v698, %v617
      %v737 = vadd.f32 %v694, %v621
      %v738 = vadd.f32 %v698, %v623
      %v739 = vadd.f32 %v694, %v625
      %v740 = vadd.f32 %v698, %v627
      %v741 = vadd.f32 %v694, %v631
      %v742 = vadd.f32 %v698, %v633
      %v743 = vadd.f32 %v694, %v635
      %v744 = vadd.f32 %v698, %v637
      %v745 = vadd.f32 %v694, %v641
      %v746 = vadd.f32 %v698, %v643
      %v747 = vadd.f32 %v694, %v645
      %v748 = vadd.f32 %v698, %v647
      %v749 = vadd.f32 %v694, %v651
      %v750 = vadd.f32 %v698, %v653
      %v751 = vadd.f32 %v694, %v655
      %v752 = vadd.f32 %v698, %v657
      %v753 = vadd.f32 %v694, %v661
      %v754 = vadd.f32 %v698, %v663
      %v755 = vadd.f32 %v694, %v665
      %v756 = vadd.f32 %v698, %v667
      %v757 = vadd.f32 %v694, %v671
      %v758 = vadd.f32 %v698, %v673
      %v759 = vadd.f32 %v694, %v675
      %v760 = vadd.f32 %v698, %v677
      %v761 = vadd.f32 %v694, %v681
      %v762 = vadd.f32 %v698, %v683
      %v763 = vadd.f32 %v694, %v685
      %v764 = vadd.f32 %v698, %v687
      %v765 = vlaneseq
      %v766 = vand.u32 %v765, 127
      %v767 = vadd.s32 %v766, 128
      %v768 = vmin.f32 %v701, %v702
      %769 = vmin.xlane.f32.xlu0 %v768
      %v770 = vpop.xlane.xlu0 %769
      %v771 = vmin.f32 %v703, %v704
      %772 = vmin.xlane.f32.xlu0 %v771
      %v773 = vpop.xlane.xlu0 %772
      %v774 = vmin.f32 %v705, %v706
      %775 = vmin.xlane.f32.xlu0 %v774
      %v776 = vpop.xlane.xlu0 %775
      %v777 = vmin.f32 %v707, %v708
      %778 = vmin.xlane.f32.xlu0 %v777
      %v779 = vpop.xlane.xlu0 %778
      %v780 = vmin.f32 %v709, %v710
      %781 = vmin.xlane.f32.xlu0 %v780
      %v782 = vpop.xlane.xlu0 %781
      %v783 = vmin.f32 %v711, %v712
      %784 = vmin.xlane.f32.xlu0 %v783
      %v785 = vpop.xlane.xlu0 %784
      %v786 = vmin.f32 %v713, %v714
      %787 = vmin.xlane.f32.xlu0 %v786
      %v788 = vpop.xlane.xlu0 %787
      %v789 = vmin.f32 %v715, %v716
      %790 = vmin.xlane.f32.xlu0 %v789
      %v791 = vpop.xlane.xlu0 %790
      %v792 = vmin.f32 %v717, %v718
      %793 = vmin.xlane.f32.xlu0 %v792
      %v794 = vpop.xlane.xlu0 %793
      %v795 = vmin.f32 %v719, %v720
      %796 = vmin.xlane.f32.xlu0 %v795
      %v797 = vpop.xlane.xlu0 %796
      %v798 = vmin.f32 %v721, %v722
      %799 = vmin.xlane.f32.xlu0 %v798
      %v800 = vpop.xlane.xlu0 %799
      %v801 = vmin.f32 %v723, %v724
      %802 = vmin.xlane.f32.xlu0 %v801
      %v803 = vpop.xlane.xlu0 %802
      %v804 = vmin.f32 %v725, %v726
      %805 = vmin.xlane.f32.xlu0 %v804
      %v806 = vpop.xlane.xlu0 %805
      %v807 = vmin.f32 %v727, %v728
      %808 = vmin.xlane.f32.xlu0 %v807
      %v809 = vpop.xlane.xlu0 %808
      %v810 = vmin.f32 %v729, %v730
      %811 = vmin.xlane.f32.xlu0 %v810
      %v812 = vpop.xlane.xlu0 %811
      %v813 = vmin.f32 %v731, %v732
      %814 = vmin.xlane.f32.xlu0 %v813
      %v815 = vpop.xlane.xlu0 %814
      %v816 = vmin.f32 %v733, %v734
      %817 = vmin.xlane.f32.xlu0 %v816
      %v818 = vpop.xlane.xlu0 %817
      %v819 = vmin.f32 %v735, %v736
      %820 = vmin.xlane.f32.xlu0 %v819
      %v821 = vpop.xlane.xlu0 %820
      %v822 = vmin.f32 %v737, %v738
      %823 = vmin.xlane.f32.xlu0 %v822
      %v824 = vpop.xlane.xlu0 %823
      %v825 = vmin.f32 %v739, %v740
      %826 = vmin.xlane.f32.xlu0 %v825
      %v827 = vpop.xlane.xlu0 %826
      %v828 = vmin.f32 %v741, %v742
      %829 = vmin.xlane.f32.xlu0 %v828
      %v830 = vpop.xlane.xlu0 %829
      %v831 = vmin.f32 %v743, %v744
      %832 = vmin.xlane.f32.xlu0 %v831
      %v833 = vpop.xlane.xlu0 %832
      %v834 = vmin.f32 %v745, %v746
      %835 = vmin.xlane.f32.xlu0 %v834
      %v836 = vpop.xlane.xlu0 %835
      %v837 = vmin.f32 %v747, %v748
      %838 = vmin.xlane.f32.xlu0 %v837
      %v839 = vpop.xlane.xlu0 %838
      %v840 = vmin.f32 %v749, %v750
      %841 = vmin.xlane.f32.xlu0 %v840
      %v842 = vpop.xlane.xlu0 %841
      %v843 = vmin.f32 %v751, %v752
      %844 = vmin.xlane.f32.xlu0 %v843
      %v845 = vpop.xlane.xlu0 %844
      %v846 = vmin.f32 %v753, %v754
      %847 = vmin.xlane.f32.xlu0 %v846
      %v848 = vpop.xlane.xlu0 %847
      %v849 = vmin.f32 %v755, %v756
      %850 = vmin.xlane.f32.xlu0 %v849
      %v851 = vpop.xlane.xlu0 %850
      %v852 = vmin.f32 %v757, %v758
      %853 = vmin.xlane.f32.xlu0 %v852
      %v854 = vpop.xlane.xlu0 %853
      %v855 = vmin.f32 %v759, %v760
      %856 = vmin.xlane.f32.xlu0 %v855
      %v857 = vpop.xlane.xlu0 %856
      %v858 = vmin.f32 %v761, %v762
      %859 = vmin.xlane.f32.xlu0 %v858
      %v860 = vpop.xlane.xlu0 %859
      %v861 = vmin.f32 %v763, %v764
      %862 = vmin.xlane.f32.xlu0 %v861
      %v863 = vpop.xlane.xlu0 %862
      %vm864 = vcmp.eq.f32.partialorder %v701, %v770
      %vm865 = vcmp.eq.f32.partialorder %v702, %v770
      %vm866 = vcmp.eq.f32.partialorder %v703, %v773
      %vm867 = vcmp.eq.f32.partialorder %v704, %v773
      %vm868 = vcmp.eq.f32.partialorder %v705, %v776
      %vm869 = vcmp.eq.f32.partialorder %v706, %v776
      %vm870 = vcmp.eq.f32.partialorder %v707, %v779
      %vm871 = vcmp.eq.f32.partialorder %v708, %v779
      %vm872 = vcmp.eq.f32.partialorder %v709, %v782
      %vm873 = vcmp.eq.f32.partialorder %v710, %v782
      %vm874 = vcmp.eq.f32.partialorder %v711, %v785
      %vm875 = vcmp.eq.f32.partialorder %v712, %v785
      %vm876 = vcmp.eq.f32.partialorder %v713, %v788
      %vm877 = vcmp.eq.f32.partialorder %v714, %v788
      %vm878 = vcmp.eq.f32.partialorder %v715, %v791
      %vm879 = vcmp.eq.f32.partialorder %v716, %v791
      %vm880 = vcmp.eq.f32.partialorder %v717, %v794
      %vm881 = vcmp.eq.f32.partialorder %v718, %v794
      %vm882 = vcmp.eq.f32.partialorder %v719, %v797
      %vm883 = vcmp.eq.f32.partialorder %v720, %v797
      %vm884 = vcmp.eq.f32.partialorder %v721, %v800
      %vm885 = vcmp.eq.f32.partialorder %v722, %v800
      %vm886 = vcmp.eq.f32.partialorder %v723, %v803
      %vm887 = vcmp.eq.f32.partialorder %v724, %v803
      %vm888 = vcmp.eq.f32.partialorder %v725, %v806
      %vm889 = vcmp.eq.f32.partialorder %v726, %v806
      %vm890 = vcmp.eq.f32.partialorder %v727, %v809
      %vm891 = vcmp.eq.f32.partialorder %v728, %v809
      %vm892 = vcmp.eq.f32.partialorder %v729, %v812
      %vm893 = vcmp.eq.f32.partialorder %v730, %v812
      %vm894 = vcmp.eq.f32.partialorder %v731, %v815
      %vm895 = vcmp.eq.f32.partialorder %v732, %v815
      %vm896 = vcmp.eq.f32.partialorder %v733, %v818
      %vm897 = vcmp.eq.f32.partialorder %v734, %v818
      %vm898 = vcmp.eq.f32.partialorder %v735, %v821
      %vm899 = vcmp.eq.f32.partialorder %v736, %v821
      %vm900 = vcmp.eq.f32.partialorder %v737, %v824
      %vm901 = vcmp.eq.f32.partialorder %v738, %v824
      %vm902 = vcmp.eq.f32.partialorder %v739, %v827
      %vm903 = vcmp.eq.f32.partialorder %v740, %v827
      %vm904 = vcmp.eq.f32.partialorder %v741, %v830
      %vm905 = vcmp.eq.f32.partialorder %v742, %v830
      %vm906 = vcmp.eq.f32.partialorder %v743, %v833
      %vm907 = vcmp.eq.f32.partialorder %v744, %v833
      %vm908 = vcmp.eq.f32.partialorder %v745, %v836
      %vm909 = vcmp.eq.f32.partialorder %v746, %v836
      %vm910 = vcmp.eq.f32.partialorder %v747, %v839
      %vm911 = vcmp.eq.f32.partialorder %v748, %v839
      %vm912 = vcmp.eq.f32.partialorder %v749, %v842
      %vm913 = vcmp.eq.f32.partialorder %v750, %v842
      %vm914 = vcmp.eq.f32.partialorder %v751, %v845
      %vm915 = vcmp.eq.f32.partialorder %v752, %v845
      %vm916 = vcmp.eq.f32.partialorder %v753, %v848
      %vm917 = vcmp.eq.f32.partialorder %v754, %v848
      %vm918 = vcmp.eq.f32.partialorder %v755, %v851
      %vm919 = vcmp.eq.f32.partialorder %v756, %v851
      %vm920 = vcmp.eq.f32.partialorder %v757, %v854
      %vm921 = vcmp.eq.f32.partialorder %v758, %v854
      %vm922 = vcmp.eq.f32.partialorder %v759, %v857
      %vm923 = vcmp.eq.f32.partialorder %v760, %v857
      %vm924 = vcmp.eq.f32.partialorder %v761, %v860
      %vm925 = vcmp.eq.f32.partialorder %v762, %v860
      %vm926 = vcmp.eq.f32.partialorder %v763, %v863
      %vm927 = vcmp.eq.f32.partialorder %v764, %v863
      %v928 = vsel %vm864, %v766, 1073741824
      %v929 = vsel %vm865, %v767, 1073741824
      %v930 = vsel %vm866, %v766, 1073741824
      %v931 = vsel %vm867, %v767, 1073741824
      %v932 = vsel %vm868, %v766, 1073741824
      %v933 = vsel %vm869, %v767, 1073741824
      %v934 = vsel %vm870, %v766, 1073741824
      %v935 = vsel %vm871, %v767, 1073741824
      %v936 = vsel %vm872, %v766, 1073741824
      %v937 = vsel %vm873, %v767, 1073741824
      %v938 = vsel %vm874, %v766, 1073741824
      %v939 = vsel %vm875, %v767, 1073741824
      %v940 = vsel %vm876, %v766, 1073741824
      %v941 = vsel %vm877, %v767, 1073741824
      %v942 = vsel %vm878, %v766, 1073741824
      %v943 = vsel %vm879, %v767, 1073741824
      %v944 = vsel %vm880, %v766, 1073741824
      %v945 = vsel %vm881, %v767, 1073741824
      %v946 = vsel %vm882, %v766, 1073741824
      %v947 = vsel %vm883, %v767, 1073741824
      %v948 = vsel %vm884, %v766, 1073741824
      %v949 = vsel %vm885, %v767, 1073741824
      %v950 = vsel %vm886, %v766, 1073741824
      %v951 = vsel %vm887, %v767, 1073741824
      %v952 = vsel %vm888, %v766, 1073741824
      %v953 = vsel %vm889, %v767, 1073741824
      %v954 = vsel %vm890, %v766, 1073741824
      %v955 = vsel %vm891, %v767, 1073741824
      %v956 = vsel %vm892, %v766, 1073741824
      %v957 = vsel %vm893, %v767, 1073741824
      %v958 = vsel %vm894, %v766, 1073741824
      %v959 = vsel %vm895, %v767, 1073741824
      %v960 = vsel %vm896, %v766, 1073741824
      %v961 = vsel %vm897, %v767, 1073741824
      %v962 = vsel %vm898, %v766, 1073741824
      %v963 = vsel %vm899, %v767, 1073741824
      %v964 = vsel %vm900, %v766, 1073741824
      %v965 = vsel %vm901, %v767, 1073741824
      %v966 = vsel %vm902, %v766, 1073741824
      %v967 = vsel %vm903, %v767, 1073741824
      %v968 = vsel %vm904, %v766, 1073741824
      %v969 = vsel %vm905, %v767, 1073741824
      %v970 = vsel %vm906, %v766, 1073741824
      %v971 = vsel %vm907, %v767, 1073741824
      %v972 = vsel %vm908, %v766, 1073741824
      %v973 = vsel %vm909, %v767, 1073741824
      %v974 = vsel %vm910, %v766, 1073741824
      %v975 = vsel %vm911, %v767, 1073741824
      %v976 = vsel %vm912, %v766, 1073741824
      %v977 = vsel %vm913, %v767, 1073741824
      %v978 = vsel %vm914, %v766, 1073741824
      %v979 = vsel %vm915, %v767, 1073741824
      %v980 = vsel %vm916, %v766, 1073741824
      %v981 = vsel %vm917, %v767, 1073741824
      %v982 = vsel %vm918, %v766, 1073741824
      %v983 = vsel %vm919, %v767, 1073741824
      %v984 = vsel %vm920, %v766, 1073741824
      %v985 = vsel %vm921, %v767, 1073741824
      %v986 = vsel %vm922, %v766, 1073741824
      %v987 = vsel %vm923, %v767, 1073741824
      %v988 = vsel %vm924, %v766, 1073741824
      %v989 = vsel %vm925, %v767, 1073741824
      %v990 = vsel %vm926, %v766, 1073741824
      %v991 = vsel %vm927, %v767, 1073741824
      %vm992 = vcmp.lt.s32.totalorder %v928, %v929
      %v993 = vsel %vm992, %v928, %v929
      %v994 = vand.u32 %v993, 65535
      %v995 = vshra.s32 %v993, 16
      %v996 = vcvt.s32.f32 %v994
      %v997 = vcvt.s32.f32 %v995
      %998 = vmin.xlane.f32.xlu0 %v997
      %v999 = vpop.xlane.xlu0 %998
      %vm1000 = vcmp.eq.f32.partialorder %v997, %v999
      %v1001 = vsel %vm1000, %v996, inf
      %1002 = vmin.xlane.f32.xlu0 %v1001
      %v1003 = vpop.xlane.xlu0 %1002
      %v1004 = vcvt.f32.s32 %v1003
      %v1005 = vcvt.f32.s32 %v999
      %v1006 = vshll.u32 %v1005, 16
      %v1007 = vadd.s32 %v1006, %v1004
      %vm1008 = vcmp.lt.s32.totalorder %v930, %v931
      %v1009 = vsel %vm1008, %v930, %v931
      %v1010 = vand.u32 %v1009, 65535
      %v1011 = vshra.s32 %v1009, 16
      %v1012 = vcvt.s32.f32 %v1010
      %v1013 = vcvt.s32.f32 %v1011
      %1014 = vmin.xlane.f32.xlu0 %v1013
      %v1015 = vpop.xlane.xlu0 %1014
      %vm1016 = vcmp.eq.f32.partialorder %v1013, %v1015
      %v1017 = vsel %vm1016, %v1012, inf
      %1018 = vmin.xlane.f32.xlu0 %v1017
      %v1019 = vpop.xlane.xlu0 %1018
      %v1020 = vcvt.f32.s32 %v1019
      %v1021 = vcvt.f32.s32 %v1015
      %v1022 = vshll.u32 %v1021, 16
      %v1023 = vadd.s32 %v1022, %v1020
      %vm1024 = vcmp.lt.s32.totalorder %v932, %v933
      %v1025 = vsel %vm1024, %v932, %v933
      %v1026 = vand.u32 %v1025, 65535
      %v1027 = vshra.s32 %v1025, 16
      %v1028 = vcvt.s32.f32 %v1026
      %v1029 = vcvt.s32.f32 %v1027
      %1030 = vmin.xlane.f32.xlu0 %v1029
      %v1031 = vpop.xlane.xlu0 %1030
      %vm1032 = vcmp.eq.f32.partialorder %v1029, %v1031
      %v1033 = vsel %vm1032, %v1028, inf
      %1034 = vmin.xlane.f32.xlu0 %v1033
      %v1035 = vpop.xlane.xlu0 %1034
      %v1036 = vcvt.f32.s32 %v1035
      %v1037 = vcvt.f32.s32 %v1031
      %v1038 = vshll.u32 %v1037, 16
      %v1039 = vadd.s32 %v1038, %v1036
      %vm1040 = vcmp.lt.s32.totalorder %v934, %v935
      %v1041 = vsel %vm1040, %v934, %v935
      %v1042 = vand.u32 %v1041, 65535
      %v1043 = vshra.s32 %v1041, 16
      %v1044 = vcvt.s32.f32 %v1042
      %v1045 = vcvt.s32.f32 %v1043
      %1046 = vmin.xlane.f32.xlu0 %v1045
      %v1047 = vpop.xlane.xlu0 %1046
      %vm1048 = vcmp.eq.f32.partialorder %v1045, %v1047
      %v1049 = vsel %vm1048, %v1044, inf
      %1050 = vmin.xlane.f32.xlu0 %v1049
      %v1051 = vpop.xlane.xlu0 %1050
      %v1052 = vcvt.f32.s32 %v1051
      %v1053 = vcvt.f32.s32 %v1047
      %v1054 = vshll.u32 %v1053, 16
      %v1055 = vadd.s32 %v1054, %v1052
      %vm1056 = vcmp.lt.s32.totalorder %v936, %v937
      %v1057 = vsel %vm1056, %v936, %v937
      %v1058 = vand.u32 %v1057, 65535
      %v1059 = vshra.s32 %v1057, 16
      %v1060 = vcvt.s32.f32 %v1058
      %v1061 = vcvt.s32.f32 %v1059
      %1062 = vmin.xlane.f32.xlu0 %v1061
      %v1063 = vpop.xlane.xlu0 %1062
      %vm1064 = vcmp.eq.f32.partialorder %v1061, %v1063
      %v1065 = vsel %vm1064, %v1060, inf
      %1066 = vmin.xlane.f32.xlu0 %v1065
      %v1067 = vpop.xlane.xlu0 %1066
      %v1068 = vcvt.f32.s32 %v1067
      %v1069 = vcvt.f32.s32 %v1063
      %v1070 = vshll.u32 %v1069, 16
      %v1071 = vadd.s32 %v1070, %v1068
      %vm1072 = vcmp.lt.s32.totalorder %v938, %v939
      %v1073 = vsel %vm1072, %v938, %v939
      %v1074 = vand.u32 %v1073, 65535
      %v1075 = vshra.s32 %v1073, 16
      %v1076 = vcvt.s32.f32 %v1074
      %v1077 = vcvt.s32.f32 %v1075
      %1078 = vmin.xlane.f32.xlu0 %v1077
      %v1079 = vpop.xlane.xlu0 %1078
      %vm1080 = vcmp.eq.f32.partialorder %v1077, %v1079
      %v1081 = vsel %vm1080, %v1076, inf
      %1082 = vmin.xlane.f32.xlu0 %v1081
      %v1083 = vpop.xlane.xlu0 %1082
      %v1084 = vcvt.f32.s32 %v1083
      %v1085 = vcvt.f32.s32 %v1079
      %v1086 = vshll.u32 %v1085, 16
      %v1087 = vadd.s32 %v1086, %v1084
      %vm1088 = vcmp.lt.s32.totalorder %v940, %v941
      %v1089 = vsel %vm1088, %v940, %v941
      %v1090 = vand.u32 %v1089, 65535
      %v1091 = vshra.s32 %v1089, 16
      %v1092 = vcvt.s32.f32 %v1090
      %v1093 = vcvt.s32.f32 %v1091
      %1094 = vmin.xlane.f32.xlu0 %v1093
      %v1095 = vpop.xlane.xlu0 %1094
      %vm1096 = vcmp.eq.f32.partialorder %v1093, %v1095
      %v1097 = vsel %vm1096, %v1092, inf
      %1098 = vmin.xlane.f32.xlu0 %v1097
      %v1099 = vpop.xlane.xlu0 %1098
      %v1100 = vcvt.f32.s32 %v1099
      %v1101 = vcvt.f32.s32 %v1095
      %v1102 = vshll.u32 %v1101, 16
      %v1103 = vadd.s32 %v1102, %v1100
      %vm1104 = vcmp.lt.s32.totalorder %v942, %v943
      %v1105 = vsel %vm1104, %v942, %v943
      %v1106 = vand.u32 %v1105, 65535
      %v1107 = vshra.s32 %v1105, 16
      %v1108 = vcvt.s32.f32 %v1106
      %v1109 = vcvt.s32.f32 %v1107
      %1110 = vmin.xlane.f32.xlu0 %v1109
      %v1111 = vpop.xlane.xlu0 %1110
      %vm1112 = vcmp.eq.f32.partialorder %v1109, %v1111
      %v1113 = vsel %vm1112, %v1108, inf
      %1114 = vmin.xlane.f32.xlu0 %v1113
      %v1115 = vpop.xlane.xlu0 %1114
      %v1116 = vcvt.f32.s32 %v1115
      %v1117 = vcvt.f32.s32 %v1111
      %v1118 = vshll.u32 %v1117, 16
      %v1119 = vadd.s32 %v1118, %v1116
      %vm1120 = vcmp.lt.s32.totalorder %v944, %v945
      %v1121 = vsel %vm1120, %v944, %v945
      %v1122 = vand.u32 %v1121, 65535
      %v1123 = vshra.s32 %v1121, 16
      %v1124 = vcvt.s32.f32 %v1122
      %v1125 = vcvt.s32.f32 %v1123
      %1126 = vmin.xlane.f32.xlu0 %v1125
      %v1127 = vpop.xlane.xlu0 %1126
      %vm1128 = vcmp.eq.f32.partialorder %v1125, %v1127
      %v1129 = vsel %vm1128, %v1124, inf
      %1130 = vmin.xlane.f32.xlu0 %v1129
      %v1131 = vpop.xlane.xlu0 %1130
      %v1132 = vcvt.f32.s32 %v1131
      %v1133 = vcvt.f32.s32 %v1127
      %v1134 = vshll.u32 %v1133, 16
      %v1135 = vadd.s32 %v1134, %v1132
      %vm1136 = vcmp.lt.s32.totalorder %v946, %v947
      %v1137 = vsel %vm1136, %v946, %v947
      %v1138 = vand.u32 %v1137, 65535
      %v1139 = vshra.s32 %v1137, 16
      %v1140 = vcvt.s32.f32 %v1138
      %v1141 = vcvt.s32.f32 %v1139
      %1142 = vmin.xlane.f32.xlu0 %v1141
      %v1143 = vpop.xlane.xlu0 %1142
      %vm1144 = vcmp.eq.f32.partialorder %v1141, %v1143
      %v1145 = vsel %vm1144, %v1140, inf
      %1146 = vmin.xlane.f32.xlu0 %v1145
      %v1147 = vpop.xlane.xlu0 %1146
      %v1148 = vcvt.f32.s32 %v1147
      %v1149 = vcvt.f32.s32 %v1143
      %v1150 = vshll.u32 %v1149, 16
      %v1151 = vadd.s32 %v1150, %v1148
      %vm1152 = vcmp.lt.s32.totalorder %v948, %v949
      %v1153 = vsel %vm1152, %v948, %v949
      %v1154 = vand.u32 %v1153, 65535
      %v1155 = vshra.s32 %v1153, 16
      %v1156 = vcvt.s32.f32 %v1154
      %v1157 = vcvt.s32.f32 %v1155
      %1158 = vmin.xlane.f32.xlu0 %v1157
      %v1159 = vpop.xlane.xlu0 %1158
      %vm1160 = vcmp.eq.f32.partialorder %v1157, %v1159
      %v1161 = vsel %vm1160, %v1156, inf
      %1162 = vmin.xlane.f32.xlu0 %v1161
      %v1163 = vpop.xlane.xlu0 %1162
      %v1164 = vcvt.f32.s32 %v1163
      %v1165 = vcvt.f32.s32 %v1159
      %v1166 = vshll.u32 %v1165, 16
      %v1167 = vadd.s32 %v1166, %v1164
      %vm1168 = vcmp.lt.s32.totalorder %v950, %v951
      %v1169 = vsel %vm1168, %v950, %v951
      %v1170 = vand.u32 %v1169, 65535
      %v1171 = vshra.s32 %v1169, 16
      %v1172 = vcvt.s32.f32 %v1170
      %v1173 = vcvt.s32.f32 %v1171
      %1174 = vmin.xlane.f32.xlu0 %v1173
      %v1175 = vpop.xlane.xlu0 %1174
      %vm1176 = vcmp.eq.f32.partialorder %v1173, %v1175
      %v1177 = vsel %vm1176, %v1172, inf
      %1178 = vmin.xlane.f32.xlu0 %v1177
      %v1179 = vpop.xlane.xlu0 %1178
      %v1180 = vcvt.f32.s32 %v1179
      %v1181 = vcvt.f32.s32 %v1175
      %v1182 = vshll.u32 %v1181, 16
      %v1183 = vadd.s32 %v1182, %v1180
      %vm1184 = vcmp.lt.s32.totalorder %v952, %v953
      %v1185 = vsel %vm1184, %v952, %v953
      %v1186 = vand.u32 %v1185, 65535
      %v1187 = vshra.s32 %v1185, 16
      %v1188 = vcvt.s32.f32 %v1186
      %v1189 = vcvt.s32.f32 %v1187
      %1190 = vmin.xlane.f32.xlu0 %v1189
      %v1191 = vpop.xlane.xlu0 %1190
      %vm1192 = vcmp.eq.f32.partialorder %v1189, %v1191
      %v1193 = vsel %vm1192, %v1188, inf
      %1194 = vmin.xlane.f32.xlu0 %v1193
      %v1195 = vpop.xlane.xlu0 %1194
      %v1196 = vcvt.f32.s32 %v1195
      %v1197 = vcvt.f32.s32 %v1191
      %v1198 = vshll.u32 %v1197, 16
      %v1199 = vadd.s32 %v1198, %v1196
      %vm1200 = vcmp.lt.s32.totalorder %v954, %v955
      %v1201 = vsel %vm1200, %v954, %v955
      %v1202 = vand.u32 %v1201, 65535
      %v1203 = vshra.s32 %v1201, 16
      %v1204 = vcvt.s32.f32 %v1202
      %v1205 = vcvt.s32.f32 %v1203
      %1206 = vmin.xlane.f32.xlu0 %v1205
      %v1207 = vpop.xlane.xlu0 %1206
      %vm1208 = vcmp.eq.f32.partialorder %v1205, %v1207
      %v1209 = vsel %vm1208, %v1204, inf
      %1210 = vmin.xlane.f32.xlu0 %v1209
      %v1211 = vpop.xlane.xlu0 %1210
      %v1212 = vcvt.f32.s32 %v1211
      %v1213 = vcvt.f32.s32 %v1207
      %v1214 = vshll.u32 %v1213, 16
      %v1215 = vadd.s32 %v1214, %v1212
      %vm1216 = vcmp.lt.s32.totalorder %v956, %v957
      %v1217 = vsel %vm1216, %v956, %v957
      %v1218 = vand.u32 %v1217, 65535
      %v1219 = vshra.s32 %v1217, 16
      %v1220 = vcvt.s32.f32 %v1218
      %v1221 = vcvt.s32.f32 %v1219
      %1222 = vmin.xlane.f32.xlu0 %v1221
      %v1223 = vpop.xlane.xlu0 %1222
      %vm1224 = vcmp.eq.f32.partialorder %v1221, %v1223
      %v1225 = vsel %vm1224, %v1220, inf
      %1226 = vmin.xlane.f32.xlu0 %v1225
      %v1227 = vpop.xlane.xlu0 %1226
      %v1228 = vcvt.f32.s32 %v1227
      %v1229 = vcvt.f32.s32 %v1223
      %v1230 = vshll.u32 %v1229, 16
      %v1231 = vadd.s32 %v1230, %v1228
      %vm1232 = vcmp.lt.s32.totalorder %v958, %v959
      %v1233 = vsel %vm1232, %v958, %v959
      %v1234 = vand.u32 %v1233, 65535
      %v1235 = vshra.s32 %v1233, 16
      %v1236 = vcvt.s32.f32 %v1234
      %v1237 = vcvt.s32.f32 %v1235
      %1238 = vmin.xlane.f32.xlu0 %v1237
      %v1239 = vpop.xlane.xlu0 %1238
      %vm1240 = vcmp.eq.f32.partialorder %v1237, %v1239
      %v1241 = vsel %vm1240, %v1236, inf
      %1242 = vmin.xlane.f32.xlu0 %v1241
      %v1243 = vpop.xlane.xlu0 %1242
      %v1244 = vcvt.f32.s32 %v1243
      %v1245 = vcvt.f32.s32 %v1239
      %v1246 = vshll.u32 %v1245, 16
      %v1247 = vadd.s32 %v1246, %v1244
      %vm1248 = vcmp.lt.s32.totalorder %v960, %v961
      %v1249 = vsel %vm1248, %v960, %v961
      %v1250 = vand.u32 %v1249, 65535
      %v1251 = vshra.s32 %v1249, 16
      %v1252 = vcvt.s32.f32 %v1250
      %v1253 = vcvt.s32.f32 %v1251
      %1254 = vmin.xlane.f32.xlu0 %v1253
      %v1255 = vpop.xlane.xlu0 %1254
      %vm1256 = vcmp.eq.f32.partialorder %v1253, %v1255
      %v1257 = vsel %vm1256, %v1252, inf
      %1258 = vmin.xlane.f32.xlu0 %v1257
      %v1259 = vpop.xlane.xlu0 %1258
      %v1260 = vcvt.f32.s32 %v1259
      %v1261 = vcvt.f32.s32 %v1255
      %v1262 = vshll.u32 %v1261, 16
      %v1263 = vadd.s32 %v1262, %v1260
      %vm1264 = vcmp.lt.s32.totalorder %v962, %v963
      %v1265 = vsel %vm1264, %v962, %v963
      %v1266 = vand.u32 %v1265, 65535
      %v1267 = vshra.s32 %v1265, 16
      %v1268 = vcvt.s32.f32 %v1266
      %v1269 = vcvt.s32.f32 %v1267
      %1270 = vmin.xlane.f32.xlu0 %v1269
      %v1271 = vpop.xlane.xlu0 %1270
      %vm1272 = vcmp.eq.f32.partialorder %v1269, %v1271
      %v1273 = vsel %vm1272, %v1268, inf
      %1274 = vmin.xlane.f32.xlu0 %v1273
      %v1275 = vpop.xlane.xlu0 %1274
      %v1276 = vcvt.f32.s32 %v1275
      %v1277 = vcvt.f32.s32 %v1271
      %v1278 = vshll.u32 %v1277, 16
      %v1279 = vadd.s32 %v1278, %v1276
      %vm1280 = vcmp.lt.s32.totalorder %v964, %v965
      %v1281 = vsel %vm1280, %v964, %v965
      %v1282 = vand.u32 %v1281, 65535
      %v1283 = vshra.s32 %v1281, 16
      %v1284 = vcvt.s32.f32 %v1282
      %v1285 = vcvt.s32.f32 %v1283
      %1286 = vmin.xlane.f32.xlu0 %v1285
      %v1287 = vpop.xlane.xlu0 %1286
      %vm1288 = vcmp.eq.f32.partialorder %v1285, %v1287
      %v1289 = vsel %vm1288, %v1284, inf
      %1290 = vmin.xlane.f32.xlu0 %v1289
      %v1291 = vpop.xlane.xlu0 %1290
      %v1292 = vcvt.f32.s32 %v1291
      %v1293 = vcvt.f32.s32 %v1287
      %v1294 = vshll.u32 %v1293, 16
      %v1295 = vadd.s32 %v1294, %v1292
      %vm1296 = vcmp.lt.s32.totalorder %v966, %v967
      %v1297 = vsel %vm1296, %v966, %v967
      %v1298 = vand.u32 %v1297, 65535
      %v1299 = vshra.s32 %v1297, 16
      %v1300 = vcvt.s32.f32 %v1298
      %v1301 = vcvt.s32.f32 %v1299
      %1302 = vmin.xlane.f32.xlu0 %v1301
      %v1303 = vpop.xlane.xlu0 %1302
      %vm1304 = vcmp.eq.f32.partialorder %v1301, %v1303
      %v1305 = vsel %vm1304, %v1300, inf
      %1306 = vmin.xlane.f32.xlu0 %v1305
      %v1307 = vpop.xlane.xlu0 %1306
      %v1308 = vcvt.f32.s32 %v1307
      %v1309 = vcvt.f32.s32 %v1303
      %v1310 = vshll.u32 %v1309, 16
      %v1311 = vadd.s32 %v1310, %v1308
      %vm1312 = vcmp.lt.s32.totalorder %v968, %v969
      %v1313 = vsel %vm1312, %v968, %v969
      %v1314 = vand.u32 %v1313, 65535
      %v1315 = vshra.s32 %v1313, 16
      %v1316 = vcvt.s32.f32 %v1314
      %v1317 = vcvt.s32.f32 %v1315
      %1318 = vmin.xlane.f32.xlu0 %v1317
      %v1319 = vpop.xlane.xlu0 %1318
      %vm1320 = vcmp.eq.f32.partialorder %v1317, %v1319
      %v1321 = vsel %vm1320, %v1316, inf
      %1322 = vmin.xlane.f32.xlu0 %v1321
      %v1323 = vpop.xlane.xlu0 %1322
      %v1324 = vcvt.f32.s32 %v1323
      %v1325 = vcvt.f32.s32 %v1319
      %v1326 = vshll.u32 %v1325, 16
      %v1327 = vadd.s32 %v1326, %v1324
      %vm1328 = vcmp.lt.s32.totalorder %v970, %v971
      %v1329 = vsel %vm1328, %v970, %v971
      %v1330 = vand.u32 %v1329, 65535
      %v1331 = vshra.s32 %v1329, 16
      %v1332 = vcvt.s32.f32 %v1330
      %v1333 = vcvt.s32.f32 %v1331
      %1334 = vmin.xlane.f32.xlu0 %v1333
      %v1335 = vpop.xlane.xlu0 %1334
      %vm1336 = vcmp.eq.f32.partialorder %v1333, %v1335
      %v1337 = vsel %vm1336, %v1332, inf
      %1338 = vmin.xlane.f32.xlu0 %v1337
      %v1339 = vpop.xlane.xlu0 %1338
      %v1340 = vcvt.f32.s32 %v1339
      %v1341 = vcvt.f32.s32 %v1335
      %v1342 = vshll.u32 %v1341, 16
      %v1343 = vadd.s32 %v1342, %v1340
      %vm1344 = vcmp.lt.s32.totalorder %v972, %v973
      %v1345 = vsel %vm1344, %v972, %v973
      %v1346 = vand.u32 %v1345, 65535
      %v1347 = vshra.s32 %v1345, 16
      %v1348 = vcvt.s32.f32 %v1346
      %v1349 = vcvt.s32.f32 %v1347
      %1350 = vmin.xlane.f32.xlu0 %v1349
      %v1351 = vpop.xlane.xlu0 %1350
      %vm1352 = vcmp.eq.f32.partialorder %v1349, %v1351
      %v1353 = vsel %vm1352, %v1348, inf
      %1354 = vmin.xlane.f32.xlu0 %v1353
      %v1355 = vpop.xlane.xlu0 %1354
      %v1356 = vcvt.f32.s32 %v1355
      %v1357 = vcvt.f32.s32 %v1351
      %v1358 = vshll.u32 %v1357, 16
      %v1359 = vadd.s32 %v1358, %v1356
      %vm1360 = vcmp.lt.s32.totalorder %v974, %v975
      %v1361 = vsel %vm1360, %v974, %v975
      %v1362 = vand.u32 %v1361, 65535
      %v1363 = vshra.s32 %v1361, 16
      %v1364 = vcvt.s32.f32 %v1362
      %v1365 = vcvt.s32.f32 %v1363
      %1366 = vmin.xlane.f32.xlu0 %v1365
      %v1367 = vpop.xlane.xlu0 %1366
      %vm1368 = vcmp.eq.f32.partialorder %v1365, %v1367
      %v1369 = vsel %vm1368, %v1364, inf
      %1370 = vmin.xlane.f32.xlu0 %v1369
      %v1371 = vpop.xlane.xlu0 %1370
      %v1372 = vcvt.f32.s32 %v1371
      %v1373 = vcvt.f32.s32 %v1367
      %v1374 = vshll.u32 %v1373, 16
      %v1375 = vadd.s32 %v1374, %v1372
      %vm1376 = vcmp.lt.s32.totalorder %v976, %v977
      %v1377 = vsel %vm1376, %v976, %v977
      %v1378 = vand.u32 %v1377, 65535
      %v1379 = vshra.s32 %v1377, 16
      %v1380 = vcvt.s32.f32 %v1378
      %v1381 = vcvt.s32.f32 %v1379
      %1382 = vmin.xlane.f32.xlu0 %v1381
      %v1383 = vpop.xlane.xlu0 %1382
      %vm1384 = vcmp.eq.f32.partialorder %v1381, %v1383
      %v1385 = vsel %vm1384, %v1380, inf
      %1386 = vmin.xlane.f32.xlu0 %v1385
      %v1387 = vpop.xlane.xlu0 %1386
      %v1388 = vcvt.f32.s32 %v1387
      %v1389 = vcvt.f32.s32 %v1383
      %v1390 = vshll.u32 %v1389, 16
      %v1391 = vadd.s32 %v1390, %v1388
      %vm1392 = vcmp.lt.s32.totalorder %v978, %v979
      %v1393 = vsel %vm1392, %v978, %v979
      %v1394 = vand.u32 %v1393, 65535
      %v1395 = vshra.s32 %v1393, 16
      %v1396 = vcvt.s32.f32 %v1394
      %v1397 = vcvt.s32.f32 %v1395
      %1398 = vmin.xlane.f32.xlu0 %v1397
      %v1399 = vpop.xlane.xlu0 %1398
      %vm1400 = vcmp.eq.f32.partialorder %v1397, %v1399
      %v1401 = vsel %vm1400, %v1396, inf
      %1402 = vmin.xlane.f32.xlu0 %v1401
      %v1403 = vpop.xlane.xlu0 %1402
      %v1404 = vcvt.f32.s32 %v1403
      %v1405 = vcvt.f32.s32 %v1399
      %v1406 = vshll.u32 %v1405, 16
      %v1407 = vadd.s32 %v1406, %v1404
      %vm1408 = vcmp.lt.s32.totalorder %v980, %v981
      %v1409 = vsel %vm1408, %v980, %v981
      %v1410 = vand.u32 %v1409, 65535
      %v1411 = vshra.s32 %v1409, 16
      %v1412 = vcvt.s32.f32 %v1410
      %v1413 = vcvt.s32.f32 %v1411
      %1414 = vmin.xlane.f32.xlu0 %v1413
      %v1415 = vpop.xlane.xlu0 %1414
      %vm1416 = vcmp.eq.f32.partialorder %v1413, %v1415
      %v1417 = vsel %vm1416, %v1412, inf
      %1418 = vmin.xlane.f32.xlu0 %v1417
      %v1419 = vpop.xlane.xlu0 %1418
      %v1420 = vcvt.f32.s32 %v1419
      %v1421 = vcvt.f32.s32 %v1415
      %v1422 = vshll.u32 %v1421, 16
      %v1423 = vadd.s32 %v1422, %v1420
      %vm1424 = vcmp.lt.s32.totalorder %v982, %v983
      %v1425 = vsel %vm1424, %v982, %v983
      %v1426 = vand.u32 %v1425, 65535
      %v1427 = vshra.s32 %v1425, 16
      %v1428 = vcvt.s32.f32 %v1426
      %v1429 = vcvt.s32.f32 %v1427
      %1430 = vmin.xlane.f32.xlu0 %v1429
      %v1431 = vpop.xlane.xlu0 %1430
      %vm1432 = vcmp.eq.f32.partialorder %v1429, %v1431
      %v1433 = vsel %vm1432, %v1428, inf
      %1434 = vmin.xlane.f32.xlu0 %v1433
      %v1435 = vpop.xlane.xlu0 %1434
      %v1436 = vcvt.f32.s32 %v1435
      %v1437 = vcvt.f32.s32 %v1431
      %v1438 = vshll.u32 %v1437, 16
      %v1439 = vadd.s32 %v1438, %v1436
      %vm1440 = vcmp.lt.s32.totalorder %v984, %v985
      %v1441 = vsel %vm1440, %v984, %v985
      %v1442 = vand.u32 %v1441, 65535
      %v1443 = vshra.s32 %v1441, 16
      %v1444 = vcvt.s32.f32 %v1442
      %v1445 = vcvt.s32.f32 %v1443
      %1446 = vmin.xlane.f32.xlu0 %v1445
      %v1447 = vpop.xlane.xlu0 %1446
      %vm1448 = vcmp.eq.f32.partialorder %v1445, %v1447
      %v1449 = vsel %vm1448, %v1444, inf
      %1450 = vmin.xlane.f32.xlu0 %v1449
      %v1451 = vpop.xlane.xlu0 %1450
      %v1452 = vcvt.f32.s32 %v1451
      %v1453 = vcvt.f32.s32 %v1447
      %v1454 = vshll.u32 %v1453, 16
      %v1455 = vadd.s32 %v1454, %v1452
      %vm1456 = vcmp.lt.s32.totalorder %v986, %v987
      %v1457 = vsel %vm1456, %v986, %v987
      %v1458 = vand.u32 %v1457, 65535
      %v1459 = vshra.s32 %v1457, 16
      %v1460 = vcvt.s32.f32 %v1458
      %v1461 = vcvt.s32.f32 %v1459
      %1462 = vmin.xlane.f32.xlu0 %v1461
      %v1463 = vpop.xlane.xlu0 %1462
      %vm1464 = vcmp.eq.f32.partialorder %v1461, %v1463
      %v1465 = vsel %vm1464, %v1460, inf
      %1466 = vmin.xlane.f32.xlu0 %v1465
      %v1467 = vpop.xlane.xlu0 %1466
      %v1468 = vcvt.f32.s32 %v1467
      %v1469 = vcvt.f32.s32 %v1463
      %v1470 = vshll.u32 %v1469, 16
      %v1471 = vadd.s32 %v1470, %v1468
      %vm1472 = vcmp.lt.s32.totalorder %v988, %v989
      %v1473 = vsel %vm1472, %v988, %v989
      %v1474 = vand.u32 %v1473, 65535
      %v1475 = vshra.s32 %v1473, 16
      %v1476 = vcvt.s32.f32 %v1474
      %v1477 = vcvt.s32.f32 %v1475
      %1478 = vmin.xlane.f32.xlu0 %v1477
      %v1479 = vpop.xlane.xlu0 %1478
      %vm1480 = vcmp.eq.f32.partialorder %v1477, %v1479
      %v1481 = vsel %vm1480, %v1476, inf
      %1482 = vmin.xlane.f32.xlu0 %v1481
      %v1483 = vpop.xlane.xlu0 %1482
      %v1484 = vcvt.f32.s32 %v1483
      %v1485 = vcvt.f32.s32 %v1479
      %v1486 = vshll.u32 %v1485, 16
      %v1487 = vadd.s32 %v1486, %v1484
      %vm1488 = vcmp.lt.s32.totalorder %v990, %v991
      %v1489 = vsel %vm1488, %v990, %v991
      %v1490 = vand.u32 %v1489, 65535
      %v1491 = vshra.s32 %v1489, 16
      %v1492 = vcvt.s32.f32 %v1490
      %v1493 = vcvt.s32.f32 %v1491
      %1494 = vmin.xlane.f32.xlu0 %v1493
      %v1495 = vpop.xlane.xlu0 %1494
      %vm1496 = vcmp.eq.f32.partialorder %v1493, %v1495
      %v1497 = vsel %vm1496, %v1492, inf
      %1498 = vmin.xlane.f32.xlu0 %v1497
      %v1499 = vpop.xlane.xlu0 %1498
      %v1500 = vcvt.f32.s32 %v1499
      %v1501 = vcvt.f32.s32 %v1495
      %v1502 = vshll.u32 %v1501, 16
      %v1503 = vadd.s32 %v1502, %v1500
      %vm1504 = vcmp.lt.f32.partialorder %v770, inf
      %vm1505 = vcmp.lt.f32.partialorder %v773, inf
      %vm1506 = vcmp.lt.f32.partialorder %v776, inf
      %vm1507 = vcmp.lt.f32.partialorder %v779, inf
      %vm1508 = vcmp.lt.f32.partialorder %v782, inf
      %vm1509 = vcmp.lt.f32.partialorder %v785, inf
      %vm1510 = vcmp.lt.f32.partialorder %v788, inf
      %vm1511 = vcmp.lt.f32.partialorder %v791, inf
      %vm1512 = vcmp.lt.f32.partialorder %v794, inf
      %vm1513 = vcmp.lt.f32.partialorder %v797, inf
      %vm1514 = vcmp.lt.f32.partialorder %v800, inf
      %vm1515 = vcmp.lt.f32.partialorder %v803, inf
      %vm1516 = vcmp.lt.f32.partialorder %v806, inf
      %vm1517 = vcmp.lt.f32.partialorder %v809, inf
      %vm1518 = vcmp.lt.f32.partialorder %v812, inf
      %vm1519 = vcmp.lt.f32.partialorder %v815, inf
      %vm1520 = vcmp.lt.f32.partialorder %v818, inf
      %vm1521 = vcmp.lt.f32.partialorder %v821, inf
      %vm1522 = vcmp.lt.f32.partialorder %v824, inf
      %vm1523 = vcmp.lt.f32.partialorder %v827, inf
      %vm1524 = vcmp.lt.f32.partialorder %v830, inf
      %vm1525 = vcmp.lt.f32.partialorder %v833, inf
      %vm1526 = vcmp.lt.f32.partialorder %v836, inf
      %vm1527 = vcmp.lt.f32.partialorder %v839, inf
      %vm1528 = vcmp.lt.f32.partialorder %v842, inf
      %vm1529 = vcmp.lt.f32.partialorder %v845, inf
      %vm1530 = vcmp.lt.f32.partialorder %v848, inf
      %vm1531 = vcmp.lt.f32.partialorder %v851, inf
      %vm1532 = vcmp.lt.f32.partialorder %v854, inf
      %vm1533 = vcmp.lt.f32.partialorder %v857, inf
      %vm1534 = vcmp.lt.f32.partialorder %v860, inf
      %vm1535 = vcmp.lt.f32.partialorder %v863, inf
      %v1536 = vsel %vm1504, %v770, inf
      %v1537 = vsel %vm1505, %v773, inf
      %v1538 = vsel %vm1506, %v776, inf
      %v1539 = vsel %vm1507, %v779, inf
      %v1540 = vsel %vm1508, %v782, inf
      %v1541 = vsel %vm1509, %v785, inf
      %v1542 = vsel %vm1510, %v788, inf
      %v1543 = vsel %vm1511, %v791, inf
      %v1544 = vsel %vm1512, %v794, inf
      %v1545 = vsel %vm1513, %v797, inf
      %v1546 = vsel %vm1514, %v800, inf
      %v1547 = vsel %vm1515, %v803, inf
      %v1548 = vsel %vm1516, %v806, inf
      %v1549 = vsel %vm1517, %v809, inf
      %v1550 = vsel %vm1518, %v812, inf
      %v1551 = vsel %vm1519, %v815, inf
      %v1552 = vsel %vm1520, %v818, inf
      %v1553 = vsel %vm1521, %v821, inf
      %v1554 = vsel %vm1522, %v824, inf
      %v1555 = vsel %vm1523, %v827, inf
      %v1556 = vsel %vm1524, %v830, inf
      %v1557 = vsel %vm1525, %v833, inf
      %v1558 = vsel %vm1526, %v836, inf
      %v1559 = vsel %vm1527, %v839, inf
      %v1560 = vsel %vm1528, %v842, inf
      %v1561 = vsel %vm1529, %v845, inf
      %v1562 = vsel %vm1530, %v848, inf
      %v1563 = vsel %vm1531, %v851, inf
      %v1564 = vsel %vm1532, %v854, inf
      %v1565 = vsel %vm1533, %v857, inf
      %v1566 = vsel %vm1534, %v860, inf
      %v1567 = vsel %vm1535, %v863, inf
      %v1568 = vsel %vm1504, %v1007, 0
      %v1569 = vsel %vm1505, %v1023, 0
      %v1570 = vsel %vm1506, %v1039, 0
      %v1571 = vsel %vm1507, %v1055, 0
      %v1572 = vsel %vm1508, %v1071, 0
      %v1573 = vsel %vm1509, %v1087, 0
      %v1574 = vsel %vm1510, %v1103, 0
      %v1575 = vsel %vm1511, %v1119, 0
      %v1576 = vsel %vm1512, %v1135, 0
      %v1577 = vsel %vm1513, %v1151, 0
      %v1578 = vsel %vm1514, %v1167, 0
      %v1579 = vsel %vm1515, %v1183, 0
      %v1580 = vsel %vm1516, %v1199, 0
      %v1581 = vsel %vm1517, %v1215, 0
      %v1582 = vsel %vm1518, %v1231, 0
      %v1583 = vsel %vm1519, %v1247, 0
      %v1584 = vsel %vm1520, %v1263, 0
      %v1585 = vsel %vm1521, %v1279, 0
      %v1586 = vsel %vm1522, %v1295, 0
      %v1587 = vsel %vm1523, %v1311, 0
      %v1588 = vsel %vm1524, %v1327, 0
      %v1589 = vsel %vm1525, %v1343, 0
      %v1590 = vsel %vm1526, %v1359, 0
      %v1591 = vsel %vm1527, %v1375, 0
      %v1592 = vsel %vm1528, %v1391, 0
      %v1593 = vsel %vm1529, %v1407, 0
      %v1594 = vsel %vm1530, %v1423, 0
      %v1595 = vsel %vm1531, %v1439, 0
      %v1596 = vsel %vm1532, %v1455, 0
      %v1597 = vsel %vm1533, %v1471, 0
      %v1598 = vsel %vm1534, %v1487, 0
      %v1599 = vsel %vm1535, %v1503, 0
      %v1600 = vld [vmem:[%s1 + $0x80] sm:$0xf]
      %v1601 = vld [vmem:[%s1 + $0x84] sm:$0xf]
      %v1602 = vld [vmem:[%s1 + $0x88] sm:$0xf]
      %v1603 = vld [vmem:[%s1 + $0x8c] sm:$0xf]
      %v1604 = vld [vmem:[%s1 + $0x90] sm:$0xf]
      %v1605 = vld [vmem:[%s1 + $0x94] sm:$0xf]
      %v1606 = vld [vmem:[%s1 + $0x98] sm:$0xf]
      %v1607 = vld [vmem:[%s1 + $0x9c] sm:$0xf]
      %v1608 = vld [vmem:[%s1 + $0xa0] sm:$0xf]
      %v1609 = vld [vmem:[%s1 + $0xa4] sm:$0xf]
      %v1610 = vld [vmem:[%s1 + $0xa8] sm:$0xf]
      %v1611 = vld [vmem:[%s1 + $0xac] sm:$0xf]
      %v1612 = vld [vmem:[%s1 + $0xb0] sm:$0xf]
      %v1613 = vld [vmem:[%s1 + $0xb4] sm:$0xf]
      %v1614 = vld [vmem:[%s1 + $0xb8] sm:$0xf]
      %v1615 = vld [vmem:[%s1 + $0xbc] sm:$0xf]
      %v1616 = vld [vmem:[%s1 + $0xc0] sm:$0xf]
      %v1617 = vld [vmem:[%s1 + $0xc4] sm:$0xf]
      %v1618 = vld [vmem:[%s1 + $0xc8] sm:$0xf]
      %v1619 = vld [vmem:[%s1 + $0xcc] sm:$0xf]
      %v1620 = vld [vmem:[%s1 + $0xd0] sm:$0xf]
      %v1621 = vld [vmem:[%s1 + $0xd4] sm:$0xf]
      %v1622 = vld [vmem:[%s1 + $0xd8] sm:$0xf]
      %v1623 = vld [vmem:[%s1 + $0xdc] sm:$0xf]
      %v1624 = vld [vmem:[%s1 + $0xe0] sm:$0xf]
      %v1625 = vld [vmem:[%s1 + $0xe4] sm:$0xf]
      %v1626 = vld [vmem:[%s1 + $0xe8] sm:$0xf]
      %v1627 = vld [vmem:[%s1 + $0xec] sm:$0xf]
      %v1628 = vld [vmem:[%s1 + $0xf0] sm:$0xf]
      %v1629 = vld [vmem:[%s1 + $0xf4] sm:$0xf]
      %v1630 = vld [vmem:[%s1 + $0xf8] sm:$0xf]
      %v1631 = vld [vmem:[%s1 + $0xfc] sm:$0xf]
      %v1664 = vunpack.c.l.b16 %v1600
      %v1665 = vunpack.c.l.b16 %v1601
      %v1666 = vunpack.c.l.b16 %v1602
      %v1667 = vunpack.c.l.b16 %v1603
      %v1668 = vunpack.c.l.b16 %v1604
      %v1669 = vunpack.c.l.b16 %v1605
      %v1670 = vunpack.c.l.b16 %v1606
      %v1671 = vunpack.c.l.b16 %v1607
      %v1672 = vunpack.c.l.b16 %v1608
      %v1673 = vunpack.c.l.b16 %v1609
      %v1674 = vunpack.c.l.b16 %v1610
      %v1675 = vunpack.c.l.b16 %v1611
      %v1676 = vunpack.c.l.b16 %v1612
      %v1677 = vunpack.c.l.b16 %v1613
      %v1678 = vunpack.c.l.b16 %v1614
      %v1679 = vunpack.c.l.b16 %v1615
      %v1680 = vunpack.c.l.b16 %v1616
      %v1681 = vunpack.c.l.b16 %v1617
      %v1682 = vunpack.c.l.b16 %v1618
      %v1683 = vunpack.c.l.b16 %v1619
      %v1684 = vunpack.c.l.b16 %v1620
      %v1685 = vunpack.c.l.b16 %v1621
      %v1686 = vunpack.c.l.b16 %v1622
      %v1687 = vunpack.c.l.b16 %v1623
      %v1688 = vunpack.c.l.b16 %v1624
      %v1689 = vunpack.c.l.b16 %v1625
      %v1690 = vunpack.c.l.b16 %v1626
      %v1691 = vunpack.c.l.b16 %v1627
      %v1692 = vunpack.c.l.b16 %v1628
      %v1693 = vunpack.c.l.b16 %v1629
      %v1694 = vunpack.c.l.b16 %v1630
      %v1695 = vunpack.c.l.b16 %v1631
      %v1696 = vpack.c.b16 %v1665, %v1664
      %v1697 = vpack.c.b16 %v1667, %v1666
      %v1698 = vpack.c.b16 %v1669, %v1668
      %v1699 = vpack.c.b16 %v1671, %v1670
      %v1700 = vpack.c.b16 %v1673, %v1672
      %v1701 = vpack.c.b16 %v1675, %v1674
      %v1702 = vpack.c.b16 %v1677, %v1676
      %v1703 = vpack.c.b16 %v1679, %v1678
      %v1704 = vpack.c.b16 %v1681, %v1680
      %v1705 = vpack.c.b16 %v1683, %v1682
      %v1706 = vpack.c.b16 %v1685, %v1684
      %v1707 = vpack.c.b16 %v1687, %v1686
      %v1708 = vpack.c.b16 %v1689, %v1688
      %v1709 = vpack.c.b16 %v1691, %v1690
      %v1710 = vpack.c.b16 %v1693, %v1692
      %v1711 = vpack.c.b16 %v1695, %v1694
      %v1713 = vsel %vm399, %v1696, 0
      %v1716 = vsel %vm399, %v1697, 0
      %v1719 = vsel %vm399, %v1698, 0
      %v1722 = vsel %vm399, %v1699, 0
      %v1725 = vsel %vm399, %v1700, 0
      %v1728 = vsel %vm399, %v1701, 0
      %v1731 = vsel %vm399, %v1702, 0
      %v1734 = vsel %vm399, %v1703, 0
      %v1737 = vsel %vm399, %v1704, 0
      %v1740 = vsel %vm399, %v1705, 0
      %v1743 = vsel %vm399, %v1706, 0
      %v1746 = vsel %vm399, %v1707, 0
      %v1749 = vsel %vm399, %v1708, 0
      %v1752 = vsel %vm399, %v1709, 0
      %v1755 = vsel %vm399, %v1710, 0
      %v1758 = vsel %vm399, %v1711, 0
      %1760 = vmatprep.subr.bf16.mxu0 0
      %1761 = vmatpush1.bf16.xpose.msra.mxu0 %v1713
      %1762 = vmatprep.subr.bf16.mxu0 0
      %1763 = vmatpush1.bf16.xpose.msra.mxu0 %v1716
      %1764 = vmatprep.subr.bf16.mxu0 0
      %1765 = vmatpush1.bf16.xpose.msra.mxu0 %v1719
      %1766 = vmatprep.subr.bf16.mxu0 0
      %1767 = vmatpush1.bf16.xpose.msra.mxu0 %v1722
      %1768 = vmatprep.subr.bf16.mxu0 0
      %1769 = vmatpush1.bf16.xpose.msra.mxu0 %v1725
      %1770 = vmatprep.subr.bf16.mxu0 0
      %1771 = vmatpush1.bf16.xpose.msra.mxu0 %v1728
      %1772 = vmatprep.subr.bf16.mxu0 0
      %1773 = vmatpush1.bf16.xpose.msra.mxu0 %v1731
      %1774 = vmatprep.subr.bf16.mxu0 0
      %1775 = vmatpush1.bf16.xpose.msra.mxu0 %v1734
      %1776 = vmatprep.subr.bf16.mxu0 0
      %1777 = vmatpush1.bf16.xpose.msra.mxu0 %v1737
      %1778 = vmatprep.subr.bf16.mxu0 0
      %1779 = vmatpush1.bf16.xpose.msra.mxu0 %v1740
      %1780 = vmatprep.subr.bf16.mxu0 0
      %1781 = vmatpush1.bf16.xpose.msra.mxu0 %v1743
      %1782 = vmatprep.subr.bf16.mxu0 0
      %1783 = vmatpush1.bf16.xpose.msra.mxu0 %v1746
      %1784 = vmatprep.subr.bf16.mxu0 0
      %1785 = vmatpush1.bf16.xpose.msra.mxu0 %v1749
      %1786 = vmatprep.subr.bf16.mxu0 0
      %1787 = vmatpush1.bf16.xpose.msra.mxu0 %v1752
      %1788 = vmatprep.subr.bf16.mxu0 0
      %1789 = vmatpush1.bf16.xpose.msra.mxu0 %v1755
      %1790 = vmatprep.subr.bf16.mxu0 0
      %1791 = vmatpush1.bf16.xpose.msra.mxu0 %v1758
      %1792 = vmatprep.mubr.bf16.mxu0 0
      %1793 = vmatmul.mubr.bf16.gmra.mrb[0].mxu0 %v401
      %v1794 = vpop.f32.mrb[0].mxu0
      %v1795 = vadd.f32 0.0, %v1794
      %v1796 = vpop.f32.mrb[0].mxu0
      %v1797 = vadd.f32 0.0, %v1796
      %v1798 = vpop.f32.mrb[0].mxu0
      %v1799 = vadd.f32 0.0, %v1798
      %v1800 = vpop.f32.mrb[0].mxu0
      %v1801 = vadd.f32 0.0, %v1800
      %1802 = vmatprep.mubr.bf16.mxu0 0
      %1803 = vmatmul.mubr.bf16.gmra.mrb[0].mxu0 %v404
      %v1804 = vpop.f32.mrb[0].mxu0
      %v1805 = vadd.f32 0.0, %v1804
      %v1806 = vpop.f32.mrb[0].mxu0
      %v1807 = vadd.f32 0.0, %v1806
      %v1808 = vpop.f32.mrb[0].mxu0
      %v1809 = vadd.f32 0.0, %v1808
      %v1810 = vpop.f32.mrb[0].mxu0
      %v1811 = vadd.f32 0.0, %v1810
      %1812 = vmatprep.mubr.bf16.mxu0 0
      %1813 = vmatmul.mubr.bf16.gmra.mrb[0].mxu0 %v407
      %v1814 = vpop.f32.mrb[0].mxu0
      %v1815 = vadd.f32 0.0, %v1814
      %v1816 = vpop.f32.mrb[0].mxu0
      %v1817 = vadd.f32 0.0, %v1816
      %v1818 = vpop.f32.mrb[0].mxu0
      %v1819 = vadd.f32 0.0, %v1818
      %v1820 = vpop.f32.mrb[0].mxu0
      %v1821 = vadd.f32 0.0, %v1820
      %1822 = vmatprep.mubr.bf16.mxu0 0
      %1823 = vmatmul.mubr.bf16.gmra.mrb[0].mxu0 %v410
      %v1824 = vpop.f32.mrb[0].mxu0
      %v1825 = vadd.f32 0.0, %v1824
      %v1826 = vpop.f32.mrb[0].mxu0
      %v1827 = vadd.f32 0.0, %v1826
      %v1828 = vpop.f32.mrb[0].mxu0
      %v1829 = vadd.f32 0.0, %v1828
      %v1830 = vpop.f32.mrb[0].mxu0
      %v1831 = vadd.f32 0.0, %v1830
      %1832 = vmatprep.mubr.bf16.mxu0 0
      %1833 = vmatmul.mubr.bf16.gmra.mrb[0].mxu0 %v413
      %v1834 = vpop.f32.mrb[0].mxu0
      %v1835 = vadd.f32 0.0, %v1834
      %v1836 = vpop.f32.mrb[0].mxu0
      %v1837 = vadd.f32 0.0, %v1836
      %v1838 = vpop.f32.mrb[0].mxu0
      %v1839 = vadd.f32 0.0, %v1838
      %v1840 = vpop.f32.mrb[0].mxu0
      %v1841 = vadd.f32 0.0, %v1840
      %1842 = vmatprep.mubr.bf16.mxu0 0
      %1843 = vmatmul.mubr.bf16.gmra.mrb[0].mxu0 %v416
      %v1844 = vpop.f32.mrb[0].mxu0
      %v1845 = vadd.f32 0.0, %v1844
      %v1846 = vpop.f32.mrb[0].mxu0
      %v1847 = vadd.f32 0.0, %v1846
      %v1848 = vpop.f32.mrb[0].mxu0
      %v1849 = vadd.f32 0.0, %v1848
      %v1850 = vpop.f32.mrb[0].mxu0
      %v1851 = vadd.f32 0.0, %v1850
      %1852 = vmatprep.mubr.bf16.mxu0 0
      %1853 = vmatmul.mubr.bf16.gmra.mrb[0].mxu0 %v419
      %v1854 = vpop.f32.mrb[0].mxu0
      %v1855 = vadd.f32 0.0, %v1854
      %v1856 = vpop.f32.mrb[0].mxu0
      %v1857 = vadd.f32 0.0, %v1856
      %v1858 = vpop.f32.mrb[0].mxu0
      %v1859 = vadd.f32 0.0, %v1858
      %v1860 = vpop.f32.mrb[0].mxu0
      %v1861 = vadd.f32 0.0, %v1860
      %1862 = vmatprep.mubr.bf16.mxu0 0
      %1863 = vmatmul.mubr.bf16.gmra.mrb[0].mxu0 %v422
      %v1864 = vpop.f32.mrb[0].mxu0
      %v1865 = vadd.f32 0.0, %v1864
      %v1866 = vpop.f32.mrb[0].mxu0
      %v1867 = vadd.f32 0.0, %v1866
      %v1868 = vpop.f32.mrb[0].mxu0
      %v1869 = vadd.f32 0.0, %v1868
      %v1870 = vpop.f32.mrb[0].mxu0
      %v1871 = vadd.f32 0.0, %v1870
      %1872 = vmatprep.mubr.bf16.mxu0 0
      %1873 = vmatmul.mubr.bf16.gmra.mrb[0].mxu0 %v425
      %v1874 = vpop.f32.mrb[0].mxu0
      %v1875 = vadd.f32 0.0, %v1874
      %v1876 = vpop.f32.mrb[0].mxu0
      %v1877 = vadd.f32 0.0, %v1876
      %v1878 = vpop.f32.mrb[0].mxu0
      %v1879 = vadd.f32 0.0, %v1878
      %v1880 = vpop.f32.mrb[0].mxu0
      %v1881 = vadd.f32 0.0, %v1880
      %1882 = vmatprep.mubr.bf16.mxu0 0
      %1883 = vmatmul.mubr.bf16.gmra.mrb[0].mxu0 %v428
      %v1884 = vpop.f32.mrb[0].mxu0
      %v1885 = vadd.f32 0.0, %v1884
      %v1886 = vpop.f32.mrb[0].mxu0
      %v1887 = vadd.f32 0.0, %v1886
      %v1888 = vpop.f32.mrb[0].mxu0
      %v1889 = vadd.f32 0.0, %v1888
      %v1890 = vpop.f32.mrb[0].mxu0
      %v1891 = vadd.f32 0.0, %v1890
      %1892 = vmatprep.mubr.bf16.mxu0 0
      %1893 = vmatmul.mubr.bf16.gmra.mrb[0].mxu0 %v431
      %v1894 = vpop.f32.mrb[0].mxu0
      %v1895 = vadd.f32 0.0, %v1894
      %v1896 = vpop.f32.mrb[0].mxu0
      %v1897 = vadd.f32 0.0, %v1896
      %v1898 = vpop.f32.mrb[0].mxu0
      %v1899 = vadd.f32 0.0, %v1898
      %v1900 = vpop.f32.mrb[0].mxu0
      %v1901 = vadd.f32 0.0, %v1900
      %1902 = vmatprep.mubr.bf16.mxu0 0
      %1903 = vmatmul.mubr.bf16.gmra.mrb[0].mxu0 %v434
      %v1904 = vpop.f32.mrb[0].mxu0
      %v1905 = vadd.f32 0.0, %v1904
      %v1906 = vpop.f32.mrb[0].mxu0
      %v1907 = vadd.f32 0.0, %v1906
      %v1908 = vpop.f32.mrb[0].mxu0
      %v1909 = vadd.f32 0.0, %v1908
      %v1910 = vpop.f32.mrb[0].mxu0
      %v1911 = vadd.f32 0.0, %v1910
      %1912 = vmatprep.mubr.bf16.mxu0 0
      %1913 = vmatmul.mubr.bf16.gmra.mrb[0].mxu0 %v437
      %v1914 = vpop.f32.mrb[0].mxu0
      %v1915 = vadd.f32 0.0, %v1914
      %v1916 = vpop.f32.mrb[0].mxu0
      %v1917 = vadd.f32 0.0, %v1916
      %v1918 = vpop.f32.mrb[0].mxu0
      %v1919 = vadd.f32 0.0, %v1918
      %v1920 = vpop.f32.mrb[0].mxu0
      %v1921 = vadd.f32 0.0, %v1920
      %1922 = vmatprep.mubr.bf16.mxu0 0
      %1923 = vmatmul.mubr.bf16.gmra.mrb[0].mxu0 %v440
      %v1924 = vpop.f32.mrb[0].mxu0
      %v1925 = vadd.f32 0.0, %v1924
      %v1926 = vpop.f32.mrb[0].mxu0
      %v1927 = vadd.f32 0.0, %v1926
      %v1928 = vpop.f32.mrb[0].mxu0
      %v1929 = vadd.f32 0.0, %v1928
      %v1930 = vpop.f32.mrb[0].mxu0
      %v1931 = vadd.f32 0.0, %v1930
      %1932 = vmatprep.mubr.bf16.mxu0 0
      %1933 = vmatmul.mubr.bf16.gmra.mrb[0].mxu0 %v443
      %v1934 = vpop.f32.mrb[0].mxu0
      %v1935 = vadd.f32 0.0, %v1934
      %v1936 = vpop.f32.mrb[0].mxu0
      %v1937 = vadd.f32 0.0, %v1936
      %v1938 = vpop.f32.mrb[0].mxu0
      %v1939 = vadd.f32 0.0, %v1938
      %v1940 = vpop.f32.mrb[0].mxu0
      %v1941 = vadd.f32 0.0, %v1940
      %1942 = vmatprep.mubr.bf16.mxu0 0
      %1943 = vmatmul.mubr.bf16.gmra.mrb[0].mxu0 %v446
      %v1944 = vpop.f32.mrb[0].mxu0
      %v1945 = vadd.f32 0.0, %v1944
      %v1946 = vpop.f32.mrb[0].mxu0
      %v1947 = vadd.f32 0.0, %v1946
      %v1948 = vpop.f32.mrb[0].mxu0
      %v1949 = vadd.f32 0.0, %v1948
      %v1950 = vpop.f32.mrb[0].mxu0
      %v1951 = vadd.f32 0.0, %v1950
      %1952 = vdwg.mxu0
      %v1953 = vld [vmem:[%s2 + $0x2] sm:$0x3]
      %v1955 = vlaneseq
      %v1956 = vshrl.u32 %v1955, 7
      %v1957 = vsub.s32 0, %v1956
      %v1958 = vrot.slane %v1953, %v1957
      %v1959 = vlaneseq
      %v1960 = vshrl.u32 %v1959, 7
      %v1961 = vsub.s32 1, %v1960
      %v1962 = vrot.slane %v1953, %v1961
      %v1965 = vadd.f32 %v1958, %v1795
      %v1966 = vadd.f32 %v1962, %v1797
      %v1967 = vadd.f32 %v1958, %v1799
      %v1968 = vadd.f32 %v1962, %v1801
      %v1969 = vadd.f32 %v1958, %v1805
      %v1970 = vadd.f32 %v1962, %v1807
      %v1971 = vadd.f32 %v1958, %v1809
      %v1972 = vadd.f32 %v1962, %v1811
      %v1973 = vadd.f32 %v1958, %v1815
      %v1974 = vadd.f32 %v1962, %v1817
      %v1975 = vadd.f32 %v1958, %v1819
      %v1976 = vadd.f32 %v1962, %v1821
      %v1977 = vadd.f32 %v1958, %v1825
      %v1978 = vadd.f32 %v1962, %v1827
      %v1979 = vadd.f32 %v1958, %v1829
      %v1980 = vadd.f32 %v1962, %v1831
      %v1981 = vadd.f32 %v1958, %v1835
      %v1982 = vadd.f32 %v1962, %v1837
      %v1983 = vadd.f32 %v1958, %v1839
      %v1984 = vadd.f32 %v1962, %v1841
      %v1985 = vadd.f32 %v1958, %v1845
      %v1986 = vadd.f32 %v1962, %v1847
      %v1987 = vadd.f32 %v1958, %v1849
      %v1988 = vadd.f32 %v1962, %v1851
      %v1989 = vadd.f32 %v1958, %v1855
      %v1990 = vadd.f32 %v1962, %v1857
      %v1991 = vadd.f32 %v1958, %v1859
      %v1992 = vadd.f32 %v1962, %v1861
      %v1993 = vadd.f32 %v1958, %v1865
      %v1994 = vadd.f32 %v1962, %v1867
      %v1995 = vadd.f32 %v1958, %v1869
      %v1996 = vadd.f32 %v1962, %v1871
      %v1997 = vadd.f32 %v1958, %v1875
      %v1998 = vadd.f32 %v1962, %v1877
      %v1999 = vadd.f32 %v1958, %v1879
      %v2000 = vadd.f32 %v1962, %v1881
      %v2001 = vadd.f32 %v1958, %v1885
      %v2002 = vadd.f32 %v1962, %v1887
      %v2003 = vadd.f32 %v1958, %v1889
      %v2004 = vadd.f32 %v1962, %v1891
      %v2005 = vadd.f32 %v1958, %v1895
      %v2006 = vadd.f32 %v1962, %v1897
      %v2007 = vadd.f32 %v1958, %v1899
      %v2008 = vadd.f32 %v1962, %v1901
      %v2009 = vadd.f32 %v1958, %v1905
      %v2010 = vadd.f32 %v1962, %v1907
      %v2011 = vadd.f32 %v1958, %v1909
      %v2012 = vadd.f32 %v1962, %v1911
      %v2013 = vadd.f32 %v1958, %v1915
      %v2014 = vadd.f32 %v1962, %v1917
      %v2015 = vadd.f32 %v1958, %v1919
      %v2016 = vadd.f32 %v1962, %v1921
      %v2017 = vadd.f32 %v1958, %v1925
      %v2018 = vadd.f32 %v1962, %v1927
      %v2019 = vadd.f32 %v1958, %v1929
      %v2020 = vadd.f32 %v1962, %v1931
      %v2021 = vadd.f32 %v1958, %v1935
      %v2022 = vadd.f32 %v1962, %v1937
      %v2023 = vadd.f32 %v1958, %v1939
      %v2024 = vadd.f32 %v1962, %v1941
      %v2025 = vadd.f32 %v1958, %v1945
      %v2026 = vadd.f32 %v1962, %v1947
      %v2027 = vadd.f32 %v1958, %v1949
      %v2028 = vadd.f32 %v1962, %v1951
      %v2029 = vadd.s32 %v766, 256
      %v2030 = vadd.s32 %v767, 256
      %v2031 = vmin.f32 %v1965, %v1966
      %2032 = vmin.xlane.f32.xlu0 %v2031
      %v2033 = vpop.xlane.xlu0 %2032
      %v2034 = vmin.f32 %v1967, %v1968
      %2035 = vmin.xlane.f32.xlu0 %v2034
      %v2036 = vpop.xlane.xlu0 %2035
      %v2037 = vmin.f32 %v1969, %v1970
      %2038 = vmin.xlane.f32.xlu0 %v2037
      %v2039 = vpop.xlane.xlu0 %2038
      %v2040 = vmin.f32 %v1971, %v1972
      %2041 = vmin.xlane.f32.xlu0 %v2040
      %v2042 = vpop.xlane.xlu0 %2041
      %v2043 = vmin.f32 %v1973, %v1974
      %2044 = vmin.xlane.f32.xlu0 %v2043
      %v2045 = vpop.xlane.xlu0 %2044
      %v2046 = vmin.f32 %v1975, %v1976
      %2047 = vmin.xlane.f32.xlu0 %v2046
      %v2048 = vpop.xlane.xlu0 %2047
      %v2049 = vmin.f32 %v1977, %v1978
      %2050 = vmin.xlane.f32.xlu0 %v2049
      %v2051 = vpop.xlane.xlu0 %2050
      %v2052 = vmin.f32 %v1979, %v1980
      %2053 = vmin.xlane.f32.xlu0 %v2052
      %v2054 = vpop.xlane.xlu0 %2053
      %v2055 = vmin.f32 %v1981, %v1982
      %2056 = vmin.xlane.f32.xlu0 %v2055
      %v2057 = vpop.xlane.xlu0 %2056
      %v2058 = vmin.f32 %v1983, %v1984
      %2059 = vmin.xlane.f32.xlu0 %v2058
      %v2060 = vpop.xlane.xlu0 %2059
      %v2061 = vmin.f32 %v1985, %v1986
      %2062 = vmin.xlane.f32.xlu0 %v2061
      %v2063 = vpop.xlane.xlu0 %2062
      %v2064 = vmin.f32 %v1987, %v1988
      %2065 = vmin.xlane.f32.xlu0 %v2064
      %v2066 = vpop.xlane.xlu0 %2065
      %v2067 = vmin.f32 %v1989, %v1990
      %2068 = vmin.xlane.f32.xlu0 %v2067
      %v2069 = vpop.xlane.xlu0 %2068
      %v2070 = vmin.f32 %v1991, %v1992
      %2071 = vmin.xlane.f32.xlu0 %v2070
      %v2072 = vpop.xlane.xlu0 %2071
      %v2073 = vmin.f32 %v1993, %v1994
      %2074 = vmin.xlane.f32.xlu0 %v2073
      %v2075 = vpop.xlane.xlu0 %2074
      %v2076 = vmin.f32 %v1995, %v1996
      %2077 = vmin.xlane.f32.xlu0 %v2076
      %v2078 = vpop.xlane.xlu0 %2077
      %v2079 = vmin.f32 %v1997, %v1998
      %2080 = vmin.xlane.f32.xlu0 %v2079
      %v2081 = vpop.xlane.xlu0 %2080
      %v2082 = vmin.f32 %v1999, %v2000
      %2083 = vmin.xlane.f32.xlu0 %v2082
      %v2084 = vpop.xlane.xlu0 %2083
      %v2085 = vmin.f32 %v2001, %v2002
      %2086 = vmin.xlane.f32.xlu0 %v2085
      %v2087 = vpop.xlane.xlu0 %2086
      %v2088 = vmin.f32 %v2003, %v2004
      %2089 = vmin.xlane.f32.xlu0 %v2088
      %v2090 = vpop.xlane.xlu0 %2089
      %v2091 = vmin.f32 %v2005, %v2006
      %2092 = vmin.xlane.f32.xlu0 %v2091
      %v2093 = vpop.xlane.xlu0 %2092
      %v2094 = vmin.f32 %v2007, %v2008
      %2095 = vmin.xlane.f32.xlu0 %v2094
      %v2096 = vpop.xlane.xlu0 %2095
      %v2097 = vmin.f32 %v2009, %v2010
      %2098 = vmin.xlane.f32.xlu0 %v2097
      %v2099 = vpop.xlane.xlu0 %2098
      %v2100 = vmin.f32 %v2011, %v2012
      %2101 = vmin.xlane.f32.xlu0 %v2100
      %v2102 = vpop.xlane.xlu0 %2101
      %v2103 = vmin.f32 %v2013, %v2014
      %2104 = vmin.xlane.f32.xlu0 %v2103
      %v2105 = vpop.xlane.xlu0 %2104
      %v2106 = vmin.f32 %v2015, %v2016
      %2107 = vmin.xlane.f32.xlu0 %v2106
      %v2108 = vpop.xlane.xlu0 %2107
      %v2109 = vmin.f32 %v2017, %v2018
      %2110 = vmin.xlane.f32.xlu0 %v2109
      %v2111 = vpop.xlane.xlu0 %2110
      %v2112 = vmin.f32 %v2019, %v2020
      %2113 = vmin.xlane.f32.xlu0 %v2112
      %v2114 = vpop.xlane.xlu0 %2113
      %v2115 = vmin.f32 %v2021, %v2022
      %2116 = vmin.xlane.f32.xlu0 %v2115
      %v2117 = vpop.xlane.xlu0 %2116
      %v2118 = vmin.f32 %v2023, %v2024
      %2119 = vmin.xlane.f32.xlu0 %v2118
      %v2120 = vpop.xlane.xlu0 %2119
      %v2121 = vmin.f32 %v2025, %v2026
      %2122 = vmin.xlane.f32.xlu0 %v2121
      %v2123 = vpop.xlane.xlu0 %2122
      %v2124 = vmin.f32 %v2027, %v2028
      %2125 = vmin.xlane.f32.xlu0 %v2124
      %v2126 = vpop.xlane.xlu0 %2125
      %vm2127 = vcmp.eq.f32.partialorder %v1965, %v2033
      %vm2128 = vcmp.eq.f32.partialorder %v1966, %v2033
      %vm2129 = vcmp.eq.f32.partialorder %v1967, %v2036
      %vm2130 = vcmp.eq.f32.partialorder %v1968, %v2036
      %vm2131 = vcmp.eq.f32.partialorder %v1969, %v2039
      %vm2132 = vcmp.eq.f32.partialorder %v1970, %v2039
      %vm2133 = vcmp.eq.f32.partialorder %v1971, %v2042
      %vm2134 = vcmp.eq.f32.partialorder %v1972, %v2042
      %vm2135 = vcmp.eq.f32.partialorder %v1973, %v2045
      %vm2136 = vcmp.eq.f32.partialorder %v1974, %v2045
      %vm2137 = vcmp.eq.f32.partialorder %v1975, %v2048
      %vm2138 = vcmp.eq.f32.partialorder %v1976, %v2048
      %vm2139 = vcmp.eq.f32.partialorder %v1977, %v2051
      %vm2140 = vcmp.eq.f32.partialorder %v1978, %v2051
      %vm2141 = vcmp.eq.f32.partialorder %v1979, %v2054
      %vm2142 = vcmp.eq.f32.partialorder %v1980, %v2054
      %vm2143 = vcmp.eq.f32.partialorder %v1981, %v2057
      %vm2144 = vcmp.eq.f32.partialorder %v1982, %v2057
      %vm2145 = vcmp.eq.f32.partialorder %v1983, %v2060
      %vm2146 = vcmp.eq.f32.partialorder %v1984, %v2060
      %vm2147 = vcmp.eq.f32.partialorder %v1985, %v2063
      %vm2148 = vcmp.eq.f32.partialorder %v1986, %v2063
      %vm2149 = vcmp.eq.f32.partialorder %v1987, %v2066
      %vm2150 = vcmp.eq.f32.partialorder %v1988, %v2066
      %vm2151 = vcmp.eq.f32.partialorder %v1989, %v2069
      %vm2152 = vcmp.eq.f32.partialorder %v1990, %v2069
      %vm2153 = vcmp.eq.f32.partialorder %v1991, %v2072
      %vm2154 = vcmp.eq.f32.partialorder %v1992, %v2072
      %vm2155 = vcmp.eq.f32.partialorder %v1993, %v2075
      %vm2156 = vcmp.eq.f32.partialorder %v1994, %v2075
      %vm2157 = vcmp.eq.f32.partialorder %v1995, %v2078
      %vm2158 = vcmp.eq.f32.partialorder %v1996, %v2078
      %vm2159 = vcmp.eq.f32.partialorder %v1997, %v2081
      %vm2160 = vcmp.eq.f32.partialorder %v1998, %v2081
      %vm2161 = vcmp.eq.f32.partialorder %v1999, %v2084
      %vm2162 = vcmp.eq.f32.partialorder %v2000, %v2084
      %vm2163 = vcmp.eq.f32.partialorder %v2001, %v2087
      %vm2164 = vcmp.eq.f32.partialorder %v2002, %v2087
      %vm2165 = vcmp.eq.f32.partialorder %v2003, %v2090
      %vm2166 = vcmp.eq.f32.partialorder %v2004, %v2090
      %vm2167 = vcmp.eq.f32.partialorder %v2005, %v2093
      %vm2168 = vcmp.eq.f32.partialorder %v2006, %v2093
      %vm2169 = vcmp.eq.f32.partialorder %v2007, %v2096
      %vm2170 = vcmp.eq.f32.partialorder %v2008, %v2096
      %vm2171 = vcmp.eq.f32.partialorder %v2009, %v2099
      %vm2172 = vcmp.eq.f32.partialorder %v2010, %v2099
      %vm2173 = vcmp.eq.f32.partialorder %v2011, %v2102
      %vm2174 = vcmp.eq.f32.partialorder %v2012, %v2102
      %vm2175 = vcmp.eq.f32.partialorder %v2013, %v2105
      %vm2176 = vcmp.eq.f32.partialorder %v2014, %v2105
      %vm2177 = vcmp.eq.f32.partialorder %v2015, %v2108
      %vm2178 = vcmp.eq.f32.partialorder %v2016, %v2108
      %vm2179 = vcmp.eq.f32.partialorder %v2017, %v2111
      %vm2180 = vcmp.eq.f32.partialorder %v2018, %v2111
      %vm2181 = vcmp.eq.f32.partialorder %v2019, %v2114
      %vm2182 = vcmp.eq.f32.partialorder %v2020, %v2114
      %vm2183 = vcmp.eq.f32.partialorder %v2021, %v2117
      %vm2184 = vcmp.eq.f32.partialorder %v2022, %v2117
      %vm2185 = vcmp.eq.f32.partialorder %v2023, %v2120
      %vm2186 = vcmp.eq.f32.partialorder %v2024, %v2120
      %vm2187 = vcmp.eq.f32.partialorder %v2025, %v2123
      %vm2188 = vcmp.eq.f32.partialorder %v2026, %v2123
      %vm2189 = vcmp.eq.f32.partialorder %v2027, %v2126
      %vm2190 = vcmp.eq.f32.partialorder %v2028, %v2126
      %v2191 = vsel %vm2127, %v2029, 1073741824
      %v2192 = vsel %vm2128, %v2030, 1073741824
      %v2193 = vsel %vm2129, %v2029, 1073741824
      %v2194 = vsel %vm2130, %v2030, 1073741824
      %v2195 = vsel %vm2131, %v2029, 1073741824
      %v2196 = vsel %vm2132, %v2030, 1073741824
      %v2197 = vsel %vm2133, %v2029, 1073741824
      %v2198 = vsel %vm2134, %v2030, 1073741824
      %v2199 = vsel %vm2135, %v2029, 1073741824
      %v2200 = vsel %vm2136, %v2030, 1073741824
      %v2201 = vsel %vm2137, %v2029, 1073741824
      %v2202 = vsel %vm2138, %v2030, 1073741824
      %v2203 = vsel %vm2139, %v2029, 1073741824
      %v2204 = vsel %vm2140, %v2030, 1073741824
      %v2205 = vsel %vm2141, %v2029, 1073741824
      %v2206 = vsel %vm2142, %v2030, 1073741824
      %v2207 = vsel %vm2143, %v2029, 1073741824
      %v2208 = vsel %vm2144, %v2030, 1073741824
      %v2209 = vsel %vm2145, %v2029, 1073741824
      %v2210 = vsel %vm2146, %v2030, 1073741824
      %v2211 = vsel %vm2147, %v2029, 1073741824
      %v2212 = vsel %vm2148, %v2030, 1073741824
      %v2213 = vsel %vm2149, %v2029, 1073741824
      %v2214 = vsel %vm2150, %v2030, 1073741824
      %v2215 = vsel %vm2151, %v2029, 1073741824
      %v2216 = vsel %vm2152, %v2030, 1073741824
      %v2217 = vsel %vm2153, %v2029, 1073741824
      %v2218 = vsel %vm2154, %v2030, 1073741824
      %v2219 = vsel %vm2155, %v2029, 1073741824
      %v2220 = vsel %vm2156, %v2030, 1073741824
      %v2221 = vsel %vm2157, %v2029, 1073741824
      %v2222 = vsel %vm2158, %v2030, 1073741824
      %v2223 = vsel %vm2159, %v2029, 1073741824
      %v2224 = vsel %vm2160, %v2030, 1073741824
      %v2225 = vsel %vm2161, %v2029, 1073741824
      %v2226 = vsel %vm2162, %v2030, 1073741824
      %v2227 = vsel %vm2163, %v2029, 1073741824
      %v2228 = vsel %vm2164, %v2030, 1073741824
      %v2229 = vsel %vm2165, %v2029, 1073741824
      %v2230 = vsel %vm2166, %v2030, 1073741824
      %v2231 = vsel %vm2167, %v2029, 1073741824
      %v2232 = vsel %vm2168, %v2030, 1073741824
      %v2233 = vsel %vm2169, %v2029, 1073741824
      %v2234 = vsel %vm2170, %v2030, 1073741824
      %v2235 = vsel %vm2171, %v2029, 1073741824
      %v2236 = vsel %vm2172, %v2030, 1073741824
      %v2237 = vsel %vm2173, %v2029, 1073741824
      %v2238 = vsel %vm2174, %v2030, 1073741824
      %v2239 = vsel %vm2175, %v2029, 1073741824
      %v2240 = vsel %vm2176, %v2030, 1073741824
      %v2241 = vsel %vm2177, %v2029, 1073741824
      %v2242 = vsel %vm2178, %v2030, 1073741824
      %v2243 = vsel %vm2179, %v2029, 1073741824
      %v2244 = vsel %vm2180, %v2030, 1073741824
      %v2245 = vsel %vm2181, %v2029, 1073741824
      %v2246 = vsel %vm2182, %v2030, 1073741824
      %v2247 = vsel %vm2183, %v2029, 1073741824
      %v2248 = vsel %vm2184, %v2030, 1073741824
      %v2249 = vsel %vm2185, %v2029, 1073741824
      %v2250 = vsel %vm2186, %v2030, 1073741824
      %v2251 = vsel %vm2187, %v2029, 1073741824
      %v2252 = vsel %vm2188, %v2030, 1073741824
      %v2253 = vsel %vm2189, %v2029, 1073741824
      %v2254 = vsel %vm2190, %v2030, 1073741824
      %vm2255 = vcmp.lt.s32.totalorder %v2191, %v2192
      %v2256 = vsel %vm2255, %v2191, %v2192
      %v2257 = vand.u32 %v2256, 65535
      %v2258 = vshra.s32 %v2256, 16
      %v2259 = vcvt.s32.f32 %v2257
      %v2260 = vcvt.s32.f32 %v2258
      %2261 = vmin.xlane.f32.xlu0 %v2260
      %v2262 = vpop.xlane.xlu0 %2261
      %vm2263 = vcmp.eq.f32.partialorder %v2260, %v2262
      %v2264 = vsel %vm2263, %v2259, inf
      %2265 = vmin.xlane.f32.xlu0 %v2264
      %v2266 = vpop.xlane.xlu0 %2265
      %v2267 = vcvt.f32.s32 %v2266
      %v2268 = vcvt.f32.s32 %v2262
      %v2269 = vshll.u32 %v2268, 16
      %v2270 = vadd.s32 %v2269, %v2267
      %vm2271 = vcmp.lt.s32.totalorder %v2193, %v2194
      %v2272 = vsel %vm2271, %v2193, %v2194
      %v2273 = vand.u32 %v2272, 65535
      %v2274 = vshra.s32 %v2272, 16
      %v2275 = vcvt.s32.f32 %v2273
      %v2276 = vcvt.s32.f32 %v2274
      %2277 = vmin.xlane.f32.xlu0 %v2276
      %v2278 = vpop.xlane.xlu0 %2277
      %vm2279 = vcmp.eq.f32.partialorder %v2276, %v2278
      %v2280 = vsel %vm2279, %v2275, inf
      %2281 = vmin.xlane.f32.xlu0 %v2280
      %v2282 = vpop.xlane.xlu0 %2281
      %v2283 = vcvt.f32.s32 %v2282
      %v2284 = vcvt.f32.s32 %v2278
      %v2285 = vshll.u32 %v2284, 16
      %v2286 = vadd.s32 %v2285, %v2283
      %vm2287 = vcmp.lt.s32.totalorder %v2195, %v2196
      %v2288 = vsel %vm2287, %v2195, %v2196
      %v2289 = vand.u32 %v2288, 65535
      %v2290 = vshra.s32 %v2288, 16
      %v2291 = vcvt.s32.f32 %v2289
      %v2292 = vcvt.s32.f32 %v2290
      %2293 = vmin.xlane.f32.xlu0 %v2292
      %v2294 = vpop.xlane.xlu0 %2293
      %vm2295 = vcmp.eq.f32.partialorder %v2292, %v2294
      %v2296 = vsel %vm2295, %v2291, inf
      %2297 = vmin.xlane.f32.xlu0 %v2296
      %v2298 = vpop.xlane.xlu0 %2297
      %v2299 = vcvt.f32.s32 %v2298
      %v2300 = vcvt.f32.s32 %v2294
      %v2301 = vshll.u32 %v2300, 16
      %v2302 = vadd.s32 %v2301, %v2299
      %vm2303 = vcmp.lt.s32.totalorder %v2197, %v2198
      %v2304 = vsel %vm2303, %v2197, %v2198
      %v2305 = vand.u32 %v2304, 65535
      %v2306 = vshra.s32 %v2304, 16
      %v2307 = vcvt.s32.f32 %v2305
      %v2308 = vcvt.s32.f32 %v2306
      %2309 = vmin.xlane.f32.xlu0 %v2308
      %v2310 = vpop.xlane.xlu0 %2309
      %vm2311 = vcmp.eq.f32.partialorder %v2308, %v2310
      %v2312 = vsel %vm2311, %v2307, inf
      %2313 = vmin.xlane.f32.xlu0 %v2312
      %v2314 = vpop.xlane.xlu0 %2313
      %v2315 = vcvt.f32.s32 %v2314
      %v2316 = vcvt.f32.s32 %v2310
      %v2317 = vshll.u32 %v2316, 16
      %v2318 = vadd.s32 %v2317, %v2315
      %vm2319 = vcmp.lt.s32.totalorder %v2199, %v2200
      %v2320 = vsel %vm2319, %v2199, %v2200
      %v2321 = vand.u32 %v2320, 65535
      %v2322 = vshra.s32 %v2320, 16
      %v2323 = vcvt.s32.f32 %v2321
      %v2324 = vcvt.s32.f32 %v2322
      %2325 = vmin.xlane.f32.xlu0 %v2324
      %v2326 = vpop.xlane.xlu0 %2325
      %vm2327 = vcmp.eq.f32.partialorder %v2324, %v2326
      %v2328 = vsel %vm2327, %v2323, inf
      %2329 = vmin.xlane.f32.xlu0 %v2328
      %v2330 = vpop.xlane.xlu0 %2329
      %v2331 = vcvt.f32.s32 %v2330
      %v2332 = vcvt.f32.s32 %v2326
      %v2333 = vshll.u32 %v2332, 16
      %v2334 = vadd.s32 %v2333, %v2331
      %vm2335 = vcmp.lt.s32.totalorder %v2201, %v2202
      %v2336 = vsel %vm2335, %v2201, %v2202
      %v2337 = vand.u32 %v2336, 65535
      %v2338 = vshra.s32 %v2336, 16
      %v2339 = vcvt.s32.f32 %v2337
      %v2340 = vcvt.s32.f32 %v2338
      %2341 = vmin.xlane.f32.xlu0 %v2340
      %v2342 = vpop.xlane.xlu0 %2341
      %vm2343 = vcmp.eq.f32.partialorder %v2340, %v2342
      %v2344 = vsel %vm2343, %v2339, inf
      %2345 = vmin.xlane.f32.xlu0 %v2344
      %v2346 = vpop.xlane.xlu0 %2345
      %v2347 = vcvt.f32.s32 %v2346
      %v2348 = vcvt.f32.s32 %v2342
      %v2349 = vshll.u32 %v2348, 16
      %v2350 = vadd.s32 %v2349, %v2347
      %vm2351 = vcmp.lt.s32.totalorder %v2203, %v2204
      %v2352 = vsel %vm2351, %v2203, %v2204
      %v2353 = vand.u32 %v2352, 65535
      %v2354 = vshra.s32 %v2352, 16
      %v2355 = vcvt.s32.f32 %v2353
      %v2356 = vcvt.s32.f32 %v2354
      %2357 = vmin.xlane.f32.xlu0 %v2356
      %v2358 = vpop.xlane.xlu0 %2357
      %vm2359 = vcmp.eq.f32.partialorder %v2356, %v2358
      %v2360 = vsel %vm2359, %v2355, inf
      %2361 = vmin.xlane.f32.xlu0 %v2360
      %v2362 = vpop.xlane.xlu0 %2361
      %v2363 = vcvt.f32.s32 %v2362
      %v2364 = vcvt.f32.s32 %v2358
      %v2365 = vshll.u32 %v2364, 16
      %v2366 = vadd.s32 %v2365, %v2363
      %vm2367 = vcmp.lt.s32.totalorder %v2205, %v2206
      %v2368 = vsel %vm2367, %v2205, %v2206
      %v2369 = vand.u32 %v2368, 65535
      %v2370 = vshra.s32 %v2368, 16
      %v2371 = vcvt.s32.f32 %v2369
      %v2372 = vcvt.s32.f32 %v2370
      %2373 = vmin.xlane.f32.xlu0 %v2372
      %v2374 = vpop.xlane.xlu0 %2373
      %vm2375 = vcmp.eq.f32.partialorder %v2372, %v2374
      %v2376 = vsel %vm2375, %v2371, inf
      %2377 = vmin.xlane.f32.xlu0 %v2376
      %v2378 = vpop.xlane.xlu0 %2377
      %v2379 = vcvt.f32.s32 %v2378
      %v2380 = vcvt.f32.s32 %v2374
      %v2381 = vshll.u32 %v2380, 16
      %v2382 = vadd.s32 %v2381, %v2379
      %vm2383 = vcmp.lt.s32.totalorder %v2207, %v2208
      %v2384 = vsel %vm2383, %v2207, %v2208
      %v2385 = vand.u32 %v2384, 65535
      %v2386 = vshra.s32 %v2384, 16
      %v2387 = vcvt.s32.f32 %v2385
      %v2388 = vcvt.s32.f32 %v2386
      %2389 = vmin.xlane.f32.xlu0 %v2388
      %v2390 = vpop.xlane.xlu0 %2389
      %vm2391 = vcmp.eq.f32.partialorder %v2388, %v2390
      %v2392 = vsel %vm2391, %v2387, inf
      %2393 = vmin.xlane.f32.xlu0 %v2392
      %v2394 = vpop.xlane.xlu0 %2393
      %v2395 = vcvt.f32.s32 %v2394
      %v2396 = vcvt.f32.s32 %v2390
      %v2397 = vshll.u32 %v2396, 16
      %v2398 = vadd.s32 %v2397, %v2395
      %vm2399 = vcmp.lt.s32.totalorder %v2209, %v2210
      %v2400 = vsel %vm2399, %v2209, %v2210
      %v2401 = vand.u32 %v2400, 65535
      %v2402 = vshra.s32 %v2400, 16
      %v2403 = vcvt.s32.f32 %v2401
      %v2404 = vcvt.s32.f32 %v2402
      %2405 = vmin.xlane.f32.xlu0 %v2404
      %v2406 = vpop.xlane.xlu0 %2405
      %vm2407 = vcmp.eq.f32.partialorder %v2404, %v2406
      %v2408 = vsel %vm2407, %v2403, inf
      %2409 = vmin.xlane.f32.xlu0 %v2408
      %v2410 = vpop.xlane.xlu0 %2409
      %v2411 = vcvt.f32.s32 %v2410
      %v2412 = vcvt.f32.s32 %v2406
      %v2413 = vshll.u32 %v2412, 16
      %v2414 = vadd.s32 %v2413, %v2411
      %vm2415 = vcmp.lt.s32.totalorder %v2211, %v2212
      %v2416 = vsel %vm2415, %v2211, %v2212
      %v2417 = vand.u32 %v2416, 65535
      %v2418 = vshra.s32 %v2416, 16
      %v2419 = vcvt.s32.f32 %v2417
      %v2420 = vcvt.s32.f32 %v2418
      %2421 = vmin.xlane.f32.xlu0 %v2420
      %v2422 = vpop.xlane.xlu0 %2421
      %vm2423 = vcmp.eq.f32.partialorder %v2420, %v2422
      %v2424 = vsel %vm2423, %v2419, inf
      %2425 = vmin.xlane.f32.xlu0 %v2424
      %v2426 = vpop.xlane.xlu0 %2425
      %v2427 = vcvt.f32.s32 %v2426
      %v2428 = vcvt.f32.s32 %v2422
      %v2429 = vshll.u32 %v2428, 16
      %v2430 = vadd.s32 %v2429, %v2427
      %vm2431 = vcmp.lt.s32.totalorder %v2213, %v2214
      %v2432 = vsel %vm2431, %v2213, %v2214
      %v2433 = vand.u32 %v2432, 65535
      %v2434 = vshra.s32 %v2432, 16
      %v2435 = vcvt.s32.f32 %v2433
      %v2436 = vcvt.s32.f32 %v2434
      %2437 = vmin.xlane.f32.xlu0 %v2436
      %v2438 = vpop.xlane.xlu0 %2437
      %vm2439 = vcmp.eq.f32.partialorder %v2436, %v2438
      %v2440 = vsel %vm2439, %v2435, inf
      %2441 = vmin.xlane.f32.xlu0 %v2440
      %v2442 = vpop.xlane.xlu0 %2441
      %v2443 = vcvt.f32.s32 %v2442
      %v2444 = vcvt.f32.s32 %v2438
      %v2445 = vshll.u32 %v2444, 16
      %v2446 = vadd.s32 %v2445, %v2443
      %vm2447 = vcmp.lt.s32.totalorder %v2215, %v2216
      %v2448 = vsel %vm2447, %v2215, %v2216
      %v2449 = vand.u32 %v2448, 65535
      %v2450 = vshra.s32 %v2448, 16
      %v2451 = vcvt.s32.f32 %v2449
      %v2452 = vcvt.s32.f32 %v2450
      %2453 = vmin.xlane.f32.xlu0 %v2452
      %v2454 = vpop.xlane.xlu0 %2453
      %vm2455 = vcmp.eq.f32.partialorder %v2452, %v2454
      %v2456 = vsel %vm2455, %v2451, inf
      %2457 = vmin.xlane.f32.xlu0 %v2456
      %v2458 = vpop.xlane.xlu0 %2457
      %v2459 = vcvt.f32.s32 %v2458
      %v2460 = vcvt.f32.s32 %v2454
      %v2461 = vshll.u32 %v2460, 16
      %v2462 = vadd.s32 %v2461, %v2459
      %vm2463 = vcmp.lt.s32.totalorder %v2217, %v2218
      %v2464 = vsel %vm2463, %v2217, %v2218
      %v2465 = vand.u32 %v2464, 65535
      %v2466 = vshra.s32 %v2464, 16
      %v2467 = vcvt.s32.f32 %v2465
      %v2468 = vcvt.s32.f32 %v2466
      %2469 = vmin.xlane.f32.xlu0 %v2468
      %v2470 = vpop.xlane.xlu0 %2469
      %vm2471 = vcmp.eq.f32.partialorder %v2468, %v2470
      %v2472 = vsel %vm2471, %v2467, inf
      %2473 = vmin.xlane.f32.xlu0 %v2472
      %v2474 = vpop.xlane.xlu0 %2473
      %v2475 = vcvt.f32.s32 %v2474
      %v2476 = vcvt.f32.s32 %v2470
      %v2477 = vshll.u32 %v2476, 16
      %v2478 = vadd.s32 %v2477, %v2475
      %vm2479 = vcmp.lt.s32.totalorder %v2219, %v2220
      %v2480 = vsel %vm2479, %v2219, %v2220
      %v2481 = vand.u32 %v2480, 65535
      %v2482 = vshra.s32 %v2480, 16
      %v2483 = vcvt.s32.f32 %v2481
      %v2484 = vcvt.s32.f32 %v2482
      %2485 = vmin.xlane.f32.xlu0 %v2484
      %v2486 = vpop.xlane.xlu0 %2485
      %vm2487 = vcmp.eq.f32.partialorder %v2484, %v2486
      %v2488 = vsel %vm2487, %v2483, inf
      %2489 = vmin.xlane.f32.xlu0 %v2488
      %v2490 = vpop.xlane.xlu0 %2489
      %v2491 = vcvt.f32.s32 %v2490
      %v2492 = vcvt.f32.s32 %v2486
      %v2493 = vshll.u32 %v2492, 16
      %v2494 = vadd.s32 %v2493, %v2491
      %vm2495 = vcmp.lt.s32.totalorder %v2221, %v2222
      %v2496 = vsel %vm2495, %v2221, %v2222
      %v2497 = vand.u32 %v2496, 65535
      %v2498 = vshra.s32 %v2496, 16
      %v2499 = vcvt.s32.f32 %v2497
      %v2500 = vcvt.s32.f32 %v2498
      %2501 = vmin.xlane.f32.xlu0 %v2500
      %v2502 = vpop.xlane.xlu0 %2501
      %vm2503 = vcmp.eq.f32.partialorder %v2500, %v2502
      %v2504 = vsel %vm2503, %v2499, inf
      %2505 = vmin.xlane.f32.xlu0 %v2504
      %v2506 = vpop.xlane.xlu0 %2505
      %v2507 = vcvt.f32.s32 %v2506
      %v2508 = vcvt.f32.s32 %v2502
      %v2509 = vshll.u32 %v2508, 16
      %v2510 = vadd.s32 %v2509, %v2507
      %vm2511 = vcmp.lt.s32.totalorder %v2223, %v2224
      %v2512 = vsel %vm2511, %v2223, %v2224
      %v2513 = vand.u32 %v2512, 65535
      %v2514 = vshra.s32 %v2512, 16
      %v2515 = vcvt.s32.f32 %v2513
      %v2516 = vcvt.s32.f32 %v2514
      %2517 = vmin.xlane.f32.xlu0 %v2516
      %v2518 = vpop.xlane.xlu0 %2517
      %vm2519 = vcmp.eq.f32.partialorder %v2516, %v2518
      %v2520 = vsel %vm2519, %v2515, inf
      %2521 = vmin.xlane.f32.xlu0 %v2520
      %v2522 = vpop.xlane.xlu0 %2521
      %v2523 = vcvt.f32.s32 %v2522
      %v2524 = vcvt.f32.s32 %v2518
      %v2525 = vshll.u32 %v2524, 16
      %v2526 = vadd.s32 %v2525, %v2523
      %vm2527 = vcmp.lt.s32.totalorder %v2225, %v2226
      %v2528 = vsel %vm2527, %v2225, %v2226
      %v2529 = vand.u32 %v2528, 65535
      %v2530 = vshra.s32 %v2528, 16
      %v2531 = vcvt.s32.f32 %v2529
      %v2532 = vcvt.s32.f32 %v2530
      %2533 = vmin.xlane.f32.xlu0 %v2532
      %v2534 = vpop.xlane.xlu0 %2533
      %vm2535 = vcmp.eq.f32.partialorder %v2532, %v2534
      %v2536 = vsel %vm2535, %v2531, inf
      %2537 = vmin.xlane.f32.xlu0 %v2536
      %v2538 = vpop.xlane.xlu0 %2537
      %v2539 = vcvt.f32.s32 %v2538
      %v2540 = vcvt.f32.s32 %v2534
      %v2541 = vshll.u32 %v2540, 16
      %v2542 = vadd.s32 %v2541, %v2539
      %vm2543 = vcmp.lt.s32.totalorder %v2227, %v2228
      %v2544 = vsel %vm2543, %v2227, %v2228
      %v2545 = vand.u32 %v2544, 65535
      %v2546 = vshra.s32 %v2544, 16
      %v2547 = vcvt.s32.f32 %v2545
      %v2548 = vcvt.s32.f32 %v2546
      %2549 = vmin.xlane.f32.xlu0 %v2548
      %v2550 = vpop.xlane.xlu0 %2549
      %vm2551 = vcmp.eq.f32.partialorder %v2548, %v2550
      %v2552 = vsel %vm2551, %v2547, inf
      %2553 = vmin.xlane.f32.xlu0 %v2552
      %v2554 = vpop.xlane.xlu0 %2553
      %v2555 = vcvt.f32.s32 %v2554
      %v2556 = vcvt.f32.s32 %v2550
      %v2557 = vshll.u32 %v2556, 16
      %v2558 = vadd.s32 %v2557, %v2555
      %vm2559 = vcmp.lt.s32.totalorder %v2229, %v2230
      %v2560 = vsel %vm2559, %v2229, %v2230
      %v2561 = vand.u32 %v2560, 65535
      %v2562 = vshra.s32 %v2560, 16
      %v2563 = vcvt.s32.f32 %v2561
      %v2564 = vcvt.s32.f32 %v2562
      %2565 = vmin.xlane.f32.xlu0 %v2564
      %v2566 = vpop.xlane.xlu0 %2565
      %vm2567 = vcmp.eq.f32.partialorder %v2564, %v2566
      %v2568 = vsel %vm2567, %v2563, inf
      %2569 = vmin.xlane.f32.xlu0 %v2568
      %v2570 = vpop.xlane.xlu0 %2569
      %v2571 = vcvt.f32.s32 %v2570
      %v2572 = vcvt.f32.s32 %v2566
      %v2573 = vshll.u32 %v2572, 16
      %v2574 = vadd.s32 %v2573, %v2571
      %vm2575 = vcmp.lt.s32.totalorder %v2231, %v2232
      %v2576 = vsel %vm2575, %v2231, %v2232
      %v2577 = vand.u32 %v2576, 65535
      %v2578 = vshra.s32 %v2576, 16
      %v2579 = vcvt.s32.f32 %v2577
      %v2580 = vcvt.s32.f32 %v2578
      %2581 = vmin.xlane.f32.xlu0 %v2580
      %v2582 = vpop.xlane.xlu0 %2581
      %vm2583 = vcmp.eq.f32.partialorder %v2580, %v2582
      %v2584 = vsel %vm2583, %v2579, inf
      %2585 = vmin.xlane.f32.xlu0 %v2584
      %v2586 = vpop.xlane.xlu0 %2585
      %v2587 = vcvt.f32.s32 %v2586
      %v2588 = vcvt.f32.s32 %v2582
      %v2589 = vshll.u32 %v2588, 16
      %v2590 = vadd.s32 %v2589, %v2587
      %vm2591 = vcmp.lt.s32.totalorder %v2233, %v2234
      %v2592 = vsel %vm2591, %v2233, %v2234
      %v2593 = vand.u32 %v2592, 65535
      %v2594 = vshra.s32 %v2592, 16
      %v2595 = vcvt.s32.f32 %v2593
      %v2596 = vcvt.s32.f32 %v2594
      %2597 = vmin.xlane.f32.xlu0 %v2596
      %v2598 = vpop.xlane.xlu0 %2597
      %vm2599 = vcmp.eq.f32.partialorder %v2596, %v2598
      %v2600 = vsel %vm2599, %v2595, inf
      %2601 = vmin.xlane.f32.xlu0 %v2600
      %v2602 = vpop.xlane.xlu0 %2601
      %v2603 = vcvt.f32.s32 %v2602
      %v2604 = vcvt.f32.s32 %v2598
      %v2605 = vshll.u32 %v2604, 16
      %v2606 = vadd.s32 %v2605, %v2603
      %vm2607 = vcmp.lt.s32.totalorder %v2235, %v2236
      %v2608 = vsel %vm2607, %v2235, %v2236
      %v2609 = vand.u32 %v2608, 65535
      %v2610 = vshra.s32 %v2608, 16
      %v2611 = vcvt.s32.f32 %v2609
      %v2612 = vcvt.s32.f32 %v2610
      %2613 = vmin.xlane.f32.xlu0 %v2612
      %v2614 = vpop.xlane.xlu0 %2613
      %vm2615 = vcmp.eq.f32.partialorder %v2612, %v2614
      %v2616 = vsel %vm2615, %v2611, inf
      %2617 = vmin.xlane.f32.xlu0 %v2616
      %v2618 = vpop.xlane.xlu0 %2617
      %v2619 = vcvt.f32.s32 %v2618
      %v2620 = vcvt.f32.s32 %v2614
      %v2621 = vshll.u32 %v2620, 16
      %v2622 = vadd.s32 %v2621, %v2619
      %vm2623 = vcmp.lt.s32.totalorder %v2237, %v2238
      %v2624 = vsel %vm2623, %v2237, %v2238
      %v2625 = vand.u32 %v2624, 65535
      %v2626 = vshra.s32 %v2624, 16
      %v2627 = vcvt.s32.f32 %v2625
      %v2628 = vcvt.s32.f32 %v2626
      %2629 = vmin.xlane.f32.xlu0 %v2628
      %v2630 = vpop.xlane.xlu0 %2629
      %vm2631 = vcmp.eq.f32.partialorder %v2628, %v2630
      %v2632 = vsel %vm2631, %v2627, inf
      %2633 = vmin.xlane.f32.xlu0 %v2632
      %v2634 = vpop.xlane.xlu0 %2633
      %v2635 = vcvt.f32.s32 %v2634
      %v2636 = vcvt.f32.s32 %v2630
      %v2637 = vshll.u32 %v2636, 16
      %v2638 = vadd.s32 %v2637, %v2635
      %vm2639 = vcmp.lt.s32.totalorder %v2239, %v2240
      %v2640 = vsel %vm2639, %v2239, %v2240
      %v2641 = vand.u32 %v2640, 65535
      %v2642 = vshra.s32 %v2640, 16
      %v2643 = vcvt.s32.f32 %v2641
      %v2644 = vcvt.s32.f32 %v2642
      %2645 = vmin.xlane.f32.xlu0 %v2644
      %v2646 = vpop.xlane.xlu0 %2645
      %vm2647 = vcmp.eq.f32.partialorder %v2644, %v2646
      %v2648 = vsel %vm2647, %v2643, inf
      %2649 = vmin.xlane.f32.xlu0 %v2648
      %v2650 = vpop.xlane.xlu0 %2649
      %v2651 = vcvt.f32.s32 %v2650
      %v2652 = vcvt.f32.s32 %v2646
      %v2653 = vshll.u32 %v2652, 16
      %v2654 = vadd.s32 %v2653, %v2651
      %vm2655 = vcmp.lt.s32.totalorder %v2241, %v2242
      %v2656 = vsel %vm2655, %v2241, %v2242
      %v2657 = vand.u32 %v2656, 65535
      %v2658 = vshra.s32 %v2656, 16
      %v2659 = vcvt.s32.f32 %v2657
      %v2660 = vcvt.s32.f32 %v2658
      %2661 = vmin.xlane.f32.xlu0 %v2660
      %v2662 = vpop.xlane.xlu0 %2661
      %vm2663 = vcmp.eq.f32.partialorder %v2660, %v2662
      %v2664 = vsel %vm2663, %v2659, inf
      %2665 = vmin.xlane.f32.xlu0 %v2664
      %v2666 = vpop.xlane.xlu0 %2665
      %v2667 = vcvt.f32.s32 %v2666
      %v2668 = vcvt.f32.s32 %v2662
      %v2669 = vshll.u32 %v2668, 16
      %v2670 = vadd.s32 %v2669, %v2667
      %vm2671 = vcmp.lt.s32.totalorder %v2243, %v2244
      %v2672 = vsel %vm2671, %v2243, %v2244
      %v2673 = vand.u32 %v2672, 65535
      %v2674 = vshra.s32 %v2672, 16
      %v2675 = vcvt.s32.f32 %v2673
      %v2676 = vcvt.s32.f32 %v2674
      %2677 = vmin.xlane.f32.xlu0 %v2676
      %v2678 = vpop.xlane.xlu0 %2677
      %vm2679 = vcmp.eq.f32.partialorder %v2676, %v2678
      %v2680 = vsel %vm2679, %v2675, inf
      %2681 = vmin.xlane.f32.xlu0 %v2680
      %v2682 = vpop.xlane.xlu0 %2681
      %v2683 = vcvt.f32.s32 %v2682
      %v2684 = vcvt.f32.s32 %v2678
      %v2685 = vshll.u32 %v2684, 16
      %v2686 = vadd.s32 %v2685, %v2683
      %vm2687 = vcmp.lt.s32.totalorder %v2245, %v2246
      %v2688 = vsel %vm2687, %v2245, %v2246
      %v2689 = vand.u32 %v2688, 65535
      %v2690 = vshra.s32 %v2688, 16
      %v2691 = vcvt.s32.f32 %v2689
      %v2692 = vcvt.s32.f32 %v2690
      %2693 = vmin.xlane.f32.xlu0 %v2692
      %v2694 = vpop.xlane.xlu0 %2693
      %vm2695 = vcmp.eq.f32.partialorder %v2692, %v2694
      %v2696 = vsel %vm2695, %v2691, inf
      %2697 = vmin.xlane.f32.xlu0 %v2696
      %v2698 = vpop.xlane.xlu0 %2697
      %v2699 = vcvt.f32.s32 %v2698
      %v2700 = vcvt.f32.s32 %v2694
      %v2701 = vshll.u32 %v2700, 16
      %v2702 = vadd.s32 %v2701, %v2699
      %vm2703 = vcmp.lt.s32.totalorder %v2247, %v2248
      %v2704 = vsel %vm2703, %v2247, %v2248
      %v2705 = vand.u32 %v2704, 65535
      %v2706 = vshra.s32 %v2704, 16
      %v2707 = vcvt.s32.f32 %v2705
      %v2708 = vcvt.s32.f32 %v2706
      %2709 = vmin.xlane.f32.xlu0 %v2708
      %v2710 = vpop.xlane.xlu0 %2709
      %vm2711 = vcmp.eq.f32.partialorder %v2708, %v2710
      %v2712 = vsel %vm2711, %v2707, inf
      %2713 = vmin.xlane.f32.xlu0 %v2712
      %v2714 = vpop.xlane.xlu0 %2713
      %v2715 = vcvt.f32.s32 %v2714
      %v2716 = vcvt.f32.s32 %v2710
      %v2717 = vshll.u32 %v2716, 16
      %v2718 = vadd.s32 %v2717, %v2715
      %vm2719 = vcmp.lt.s32.totalorder %v2249, %v2250
      %v2720 = vsel %vm2719, %v2249, %v2250
      %v2721 = vand.u32 %v2720, 65535
      %v2722 = vshra.s32 %v2720, 16
      %v2723 = vcvt.s32.f32 %v2721
      %v2724 = vcvt.s32.f32 %v2722
      %2725 = vmin.xlane.f32.xlu0 %v2724
      %v2726 = vpop.xlane.xlu0 %2725
      %vm2727 = vcmp.eq.f32.partialorder %v2724, %v2726
      %v2728 = vsel %vm2727, %v2723, inf
      %2729 = vmin.xlane.f32.xlu0 %v2728
      %v2730 = vpop.xlane.xlu0 %2729
      %v2731 = vcvt.f32.s32 %v2730
      %v2732 = vcvt.f32.s32 %v2726
      %v2733 = vshll.u32 %v2732, 16
      %v2734 = vadd.s32 %v2733, %v2731
      %vm2735 = vcmp.lt.s32.totalorder %v2251, %v2252
      %v2736 = vsel %vm2735, %v2251, %v2252
      %v2737 = vand.u32 %v2736, 65535
      %v2738 = vshra.s32 %v2736, 16
      %v2739 = vcvt.s32.f32 %v2737
      %v2740 = vcvt.s32.f32 %v2738
      %2741 = vmin.xlane.f32.xlu0 %v2740
      %v2742 = vpop.xlane.xlu0 %2741
      %vm2743 = vcmp.eq.f32.partialorder %v2740, %v2742
      %v2744 = vsel %vm2743, %v2739, inf
      %2745 = vmin.xlane.f32.xlu0 %v2744
      %v2746 = vpop.xlane.xlu0 %2745
      %v2747 = vcvt.f32.s32 %v2746
      %v2748 = vcvt.f32.s32 %v2742
      %v2749 = vshll.u32 %v2748, 16
      %v2750 = vadd.s32 %v2749, %v2747
      %vm2751 = vcmp.lt.s32.totalorder %v2253, %v2254
      %v2752 = vsel %vm2751, %v2253, %v2254
      %v2753 = vand.u32 %v2752, 65535
      %v2754 = vshra.s32 %v2752, 16
      %v2755 = vcvt.s32.f32 %v2753
      %v2756 = vcvt.s32.f32 %v2754
      %2757 = vmin.xlane.f32.xlu0 %v2756
      %v2758 = vpop.xlane.xlu0 %2757
      %vm2759 = vcmp.eq.f32.partialorder %v2756, %v2758
      %v2760 = vsel %vm2759, %v2755, inf
      %2761 = vmin.xlane.f32.xlu0 %v2760
      %v2762 = vpop.xlane.xlu0 %2761
      %v2763 = vcvt.f32.s32 %v2762
      %v2764 = vcvt.f32.s32 %v2758
      %v2765 = vshll.u32 %v2764, 16
      %v2766 = vadd.s32 %v2765, %v2763
      %vm2767 = vcmp.lt.f32.partialorder %v2033, %v1536
      %vm2768 = vcmp.lt.f32.partialorder %v2036, %v1537
      %vm2769 = vcmp.lt.f32.partialorder %v2039, %v1538
      %vm2770 = vcmp.lt.f32.partialorder %v2042, %v1539
      %vm2771 = vcmp.lt.f32.partialorder %v2045, %v1540
      %vm2772 = vcmp.lt.f32.partialorder %v2048, %v1541
      %vm2773 = vcmp.lt.f32.partialorder %v2051, %v1542
      %vm2774 = vcmp.lt.f32.partialorder %v2054, %v1543
      %vm2775 = vcmp.lt.f32.partialorder %v2057, %v1544
      %vm2776 = vcmp.lt.f32.partialorder %v2060, %v1545
      %vm2777 = vcmp.lt.f32.partialorder %v2063, %v1546
      %vm2778 = vcmp.lt.f32.partialorder %v2066, %v1547
      %vm2779 = vcmp.lt.f32.partialorder %v2069, %v1548
      %vm2780 = vcmp.lt.f32.partialorder %v2072, %v1549
      %vm2781 = vcmp.lt.f32.partialorder %v2075, %v1550
      %vm2782 = vcmp.lt.f32.partialorder %v2078, %v1551
      %vm2783 = vcmp.lt.f32.partialorder %v2081, %v1552
      %vm2784 = vcmp.lt.f32.partialorder %v2084, %v1553
      %vm2785 = vcmp.lt.f32.partialorder %v2087, %v1554
      %vm2786 = vcmp.lt.f32.partialorder %v2090, %v1555
      %vm2787 = vcmp.lt.f32.partialorder %v2093, %v1556
      %vm2788 = vcmp.lt.f32.partialorder %v2096, %v1557
      %vm2789 = vcmp.lt.f32.partialorder %v2099, %v1558
      %vm2790 = vcmp.lt.f32.partialorder %v2102, %v1559
      %vm2791 = vcmp.lt.f32.partialorder %v2105, %v1560
      %vm2792 = vcmp.lt.f32.partialorder %v2108, %v1561
      %vm2793 = vcmp.lt.f32.partialorder %v2111, %v1562
      %vm2794 = vcmp.lt.f32.partialorder %v2114, %v1563
      %vm2795 = vcmp.lt.f32.partialorder %v2117, %v1564
      %vm2796 = vcmp.lt.f32.partialorder %v2120, %v1565
      %vm2797 = vcmp.lt.f32.partialorder %v2123, %v1566
      %vm2798 = vcmp.lt.f32.partialorder %v2126, %v1567
      %v2799 = vsel %vm2767, %v2270, %v1568
      %v2800 = vsel %vm2768, %v2286, %v1569
      %v2801 = vsel %vm2769, %v2302, %v1570
      %v2802 = vsel %vm2770, %v2318, %v1571
      %v2803 = vsel %vm2771, %v2334, %v1572
      %v2804 = vsel %vm2772, %v2350, %v1573
      %v2805 = vsel %vm2773, %v2366, %v1574
      %v2806 = vsel %vm2774, %v2382, %v1575
      %v2807 = vsel %vm2775, %v2398, %v1576
      %v2808 = vsel %vm2776, %v2414, %v1577
      %v2809 = vsel %vm2777, %v2430, %v1578
      %v2810 = vsel %vm2778, %v2446, %v1579
      %v2811 = vsel %vm2779, %v2462, %v1580
      %v2812 = vsel %vm2780, %v2478, %v1581
      %v2813 = vsel %vm2781, %v2494, %v1582
      %v2814 = vsel %vm2782, %v2510, %v1583
      %v2815 = vsel %vm2783, %v2526, %v1584
      %v2816 = vsel %vm2784, %v2542, %v1585
      %v2817 = vsel %vm2785, %v2558, %v1586
      %v2818 = vsel %vm2786, %v2574, %v1587
      %v2819 = vsel %vm2787, %v2590, %v1588
      %v2820 = vsel %vm2788, %v2606, %v1589
      %v2821 = vsel %vm2789, %v2622, %v1590
      %v2822 = vsel %vm2790, %v2638, %v1591
      %v2823 = vsel %vm2791, %v2654, %v1592
      %v2824 = vsel %vm2792, %v2670, %v1593
      %v2825 = vsel %vm2793, %v2686, %v1594
      %v2826 = vsel %vm2794, %v2702, %v1595
      %v2827 = vsel %vm2795, %v2718, %v1596
      %v2828 = vsel %vm2796, %v2734, %v1597
      %v2829 = vsel %vm2797, %v2750, %v1598
      %v2830 = vsel %vm2798, %v2766, %v1599
      %vm2831 = vcmask 7168
      %2832 = vst.msk [vmem:[%s172] sm:$0xff] %vm2831, %v2799
      %2833 = vst.msk [vmem:[%s172 + $0x8] sm:$0xff] %vm2831, %v2800
      %2834 = vst.msk [vmem:[%s172 + $0x10] sm:$0xff] %vm2831, %v2801
      %2835 = vst.msk [vmem:[%s172 + $0x18] sm:$0xff] %vm2831, %v2802
      %2836 = vst.msk [vmem:[%s172 + $0x20] sm:$0xff] %vm2831, %v2803
      %2837 = vst.msk [vmem:[%s172 + $0x28] sm:$0xff] %vm2831, %v2804
      %2838 = vst.msk [vmem:[%s172 + $0x30] sm:$0xff] %vm2831, %v2805
      %2839 = vst.msk [vmem:[%s172 + $0x38] sm:$0xff] %vm2831, %v2806
      %2840 = vst.msk [vmem:[%s172 + $0x40] sm:$0xff] %vm2831, %v2807
      %2841 = vst.msk [vmem:[%s172 + $0x48] sm:$0xff] %vm2831, %v2808
      %2842 = vst.msk [vmem:[%s172 + $0x50] sm:$0xff] %vm2831, %v2809
      %2843 = vst.msk [vmem:[%s172 + $0x58] sm:$0xff] %vm2831, %v2810
      %2844 = vst.msk [vmem:[%s172 + $0x60] sm:$0xff] %vm2831, %v2811
      %2845 = vst.msk [vmem:[%s172 + $0x68] sm:$0xff] %vm2831, %v2812
      %2846 = vst.msk [vmem:[%s172 + $0x70] sm:$0xff] %vm2831, %v2813
      %2847 = vst.msk [vmem:[%s172 + $0x78] sm:$0xff] %vm2831, %v2814
      %2848 = vst.msk [vmem:[%s172 + $0x80] sm:$0xff] %vm2831, %v2815
      %2849 = vst.msk [vmem:[%s172 + $0x88] sm:$0xff] %vm2831, %v2816
      %2850 = vst.msk [vmem:[%s172 + $0x90] sm:$0xff] %vm2831, %v2817
      %2851 = vst.msk [vmem:[%s172 + $0x98] sm:$0xff] %vm2831, %v2818
      %2852 = vst.msk [vmem:[%s172 + $0xa0] sm:$0xff] %vm2831, %v2819
      %2853 = vst.msk [vmem:[%s172 + $0xa8] sm:$0xff] %vm2831, %v2820
      %2854 = vst.msk [vmem:[%s172 + $0xb0] sm:$0xff] %vm2831, %v2821
      %2855 = vst.msk [vmem:[%s172 + $0xb8] sm:$0xff] %vm2831, %v2822
      %2856 = vst.msk [vmem:[%s172 + $0xc0] sm:$0xff] %vm2831, %v2823
      %2857 = vst.msk [vmem:[%s172 + $0xc8] sm:$0xff] %vm2831, %v2824
      %2858 = vst.msk [vmem:[%s172 + $0xd0] sm:$0xff] %vm2831, %v2825
      %2859 = vst.msk [vmem:[%s172 + $0xd8] sm:$0xff] %vm2831, %v2826
      %2860 = vst.msk [vmem:[%s172 + $0xe0] sm:$0xff] %vm2831, %v2827
      %2861 = vst.msk [vmem:[%s172 + $0xe8] sm:$0xff] %vm2831, %v2828
      %2862 = vst.msk [vmem:[%s172 + $0xf0] sm:$0xff] %vm2831, %v2829
      %2863 = vst.msk [vmem:[%s172 + $0xf8] sm:$0xff] %vm2831, %v2830
      %s2864 = smul.u32 32, %s14
      %p2865 = scmp.lt.s32.totalorder %s2864, 63
      %s2866 = scalar_select %p2865, %s2864, 63
      %s2867 = smul.addr %s2866, 8
      %s2868 = scalar_lea.vmem %s3, %s2867
      // Predicated region
      $region33: #{vector_quantizer2_forward.1} parent=31 // pred_check
        %p2869 = pneg %p100
      $region34: #{vector_quantizer2_forward.1} parent=31 // pred_check_branch
        %2871 = sbr.rel (%p2869) target = $region36
      $region35: #{vector_quantizer2_forward.1} parent=31 // pred_region
        %s2872 = smul.u32 32, %s14
      $region36: #{vector_quantizer2_forward.1} parent=31 // pred_fallthru
        _
    $region32: #{vector_quantizer2_forward.1} parent=5 // pred_fallthru
      _
    %p2873 = scmp.le.s32.totalorder 2, %s9
    // Predicated region
    $region37: #{vector_quantizer2_forward.1} parent=5 // pred_check
      %p2874 = pneg %p2873
    $region38: #{vector_quantizer2_forward.1} parent=5 // pred_check_branch
      %2876 = sbr.rel (%p2874) target = $region40
    $region39: #{vector_quantizer2_forward.1} parent=5 // pred_region
      %s2877 = ssub.s32 %s9, 2
      // Predicated region
      $region41: #{vector_quantizer2_forward.1} parent=39 // pred_check
        %p2878 = pneg %p106
      $region42: #{vector_quantizer2_forward.1} parent=39 // pred_check_branch
        %2880 = sbr.rel (%p2878) target = $region44
      $region43: #{vector_quantizer2_forward.1} parent=39 // pred_region
        %s2881 = smul.u32 32, %s15
        %p2882 = scmp.lt.s32.totalorder %s2881, 63
        %s2883 = scalar_select %p2882, %s2881, 63
        %s2884 = smul.addr %s2883, 8
        %s2885 = scalar_lea.vmem %s3, %s2884
      $region44: #{vector_quantizer2_forward.1} parent=39 // pred_fallthru
        _
    $region40: #{vector_quantizer2_forward.1} parent=5 // pred_fallthru
      _
  $region6: #{vector_quantizer2_forward.1} parent=0 // loop_footer
    %s13 = sadd.s32 1, %s9
  $region7: #{vector_quantizer2_forward.1} parent=0 // loop_footer_branch
    %8 = sbr.rel target = $region3
  $region8: #{vector_quantizer2_forward.1} parent=0 // loop_exit
    _

</llo_original>
